<compile_context>
chip_gen: v7x
topology: tpu7x:2x2x1
jax: 0.10.0
libtpu: 0.0.40
codegen_flags: <defaults>
</compile_context>

<pallas_src>
import functools

import jax
import jax.numpy as jnp
from jax.experimental import pallas as pl
from jax.experimental.pallas import tpu as pltpu

_EPS = 1e-5        # nn.BatchNorm2d default eps
_PRELU_A = 0.25    # nn.PReLU() default init (single shared parameter)

# Union of kernel-row offsets needed by stage 1:
#   square 3x3 / vertical 3x1 (dilation 1): {-1, 0, +1}
#   atrous 3x3 (dilation 3)               : {-3, 0, +3}
_S1_ROW_OFFSETS = (-3, -1, 0, 1, 3)
_S2_ROW_OFFSETS = (-1, 0, 1)
_ROW_PAD = 3       # zero rows above/below every image inside the tall slab


# -----------------------------------------------------------------------------
# Pallas kernel: one block of `imgs` images per grid step, stacked along rows.
# All convs + activations fused; every conv stage is a few MXU matmuls against
# block-Toeplitz weight matrices prepared once in the wrapper.
# -----------------------------------------------------------------------------
def _erf_kernel(f_ref, t1_ref, t2_ref, b1_ref, slope_ref, rmask_ref, b2_ref,
                o_ref, *, H, W, Cout, band, imgs):
    C2 = 2 * Cout
    M1 = imgs * band - 2 * _ROW_PAD               # rows of the stage-1/2 slabs

    # ---- stage 1: asyConv (p2) + atrous conv (p3), fused into one accumulator.
    # acc[:, w*2C + c] : c < Cout -> p2 channel c ; c >= Cout -> p3 channel c - Cout.
    acc = jnp.zeros((M1, W * C2), jnp.float32) + b1_ref[...]
    for i, dr in enumerate(_S1_ROW_OFFSETS):
        lhs = f_ref[_ROW_PAD + dr: _ROW_PAD + dr + M1, :]       # (M1, W*Cin)
        acc = acc + jnp.dot(lhs, t1_ref[i], preferred_element_type=jnp.float32)

    # p2 lanes keep identity, p3 lanes get PReLU (slope_ref holds 1.0 / 0.25 per lane);
    # then zero the inter-image separator rows (== torch's zero padding of p2/p3
    # before the stage-2 conv).
    p = jnp.where(acc >= 0, acc, acc * slope_ref[...])
    p = p * rmask_ref[...]
    p = p.astype(t2_ref.dtype)

    # One zero row above/below so every 3-row window of stage 2 stays in-bounds.
    zrow = jnp.zeros((1, W * C2), p.dtype)
    p_ext = jnp.concatenate([zrow, p, zrow], axis=0)            # (M1 + 2, W*2*Cout)

    # ---- stage 2: 3x3 conv over concat([p2, p3]) (+ folded bias/BN), then ReLU.
    out = jnp.zeros((M1, W * Cout), jnp.float32) + b2_ref[...]
    for kh in range(3):                                         # row offset = kh - 1
        out = out + jnp.dot(p_ext[kh: kh + M1, :], t2_ref[kh],
                            preferred_element_type=jnp.float32)
    out = jnp.maximum(out, 0.0)

    # ---- scatter each image's valid H-row band (lane-dense unmasked stores).
    for b in range(imgs):
        o_ref[b] = out[b * band: b * band + H, :].astype(o_ref.dtype)


# -----------------------------------------------------------------------------
# Parameter folding + block-Toeplitz construction + wrapper
# -----------------------------------------------------------------------------
def _fold_bn(w_oihw, bn, conv_bias=None):
    """Fold inference-mode BN into conv weights (returned in HWIO) + bias."""
    gamma, beta, mean, var = bn
    s = gamma / jnp.sqrt(var + _EPS)
    w = jnp.transpose(w_oihw, (2, 3, 1, 0)) * s[None, None, None, :]
    b = beta - mean * s
    if conv_bias is not None:
        b = b + conv_bias * s
    return w, b


def _toeplitz_stack(taps, W, cin, cout_total, row_offsets):
    """One (W*cin, W*cout_total) block-Toeplitz matmul weight per kernel-row offset.

    taps: iterable of (row_off, col_off, weight[cin, cw], out_channel_off).
    Column offsets that land outside [0, W) simply produce no entries, which
    reproduces zero padding along W without padding the activations.
    """
    wi = jnp.arange(W)[:, None]      # input column
    wo = jnp.arange(W)[None, :]      # output column
    mats = {dr: jnp.zeros((W * cin, W * cout_total), jnp.float32) for dr in row_offsets}
    for dr, dc, wt, c_off in taps:
        cw = wt.shape[1]
        sel = (wi == wo + dc).astype(jnp.float32)                 # (W, W)
        t = sel[:, :, None, None] * wt[None, None, :, :]          # (W, W, cin, cw)
        t = jnp.transpose(t, (0, 2, 1, 3))                        # (W, cin, W, cw)
        full = jnp.zeros((W, cin, W, cout_total), jnp.float32)
        full = full.at[:, :, :, c_off:c_off + cw].set(t)
        mats[dr] = mats[dr] + full.reshape(W * cin, W * cout_total)
    return jnp.stack([mats[dr] for dr in row_offsets])


def erf_pallas(f_nchw, P, *, compute_dtype=jnp.bfloat16, images_per_block=None):
    N, Cin, H, W = f_nchw.shape
    Cout = P["w_sq"].shape[0]
    C2 = 2 * Cout

    if images_per_block is None:
        # Batch as many images as possible into the MXU M dimension (amortizes the
        # stationary block-Toeplitz RHS push), but keep >= 2 grid steps for larger
        # batches so both v7x TensorCores get work via the "parallel" grid axis.
        images_per_block = N if (N < 4 or N % 2) else N // 2
    B = images_per_block
    assert N % B == 0, (N, B)

    # Rows per image inside the tall slab: the image plus >= _ROW_PAD zero separator
    # rows on each side, rounded to a multiple of 8 (sublane-aligned slices).
    band = -(-(H + 2 * _ROW_PAD) // 8) * 8
    M1 = B * band - 2 * _ROW_PAD

    # ---- fold all BatchNorms (and conv biases) into the weights -------------------
    w_sq, b_sq = _fold_bn(P["w_sq"], P["bn_sq"])                 # (3,3,Cin,Cout)
    w_ver4, b_ver = _fold_bn(P["w_ver"], P["bn_ver"])            # (3,1,Cin,Cout)
    w_hor4, b_hor = _fold_bn(P["w_hor"], P["bn_hor"])            # (1,3,Cin,Cout)
    w_ver, w_hor = w_ver4[:, 0], w_hor4[0]                       # (3,Cin,Cout) each
    w_atr, b_p3 = _fold_bn(P["w_atr"], P["bn_atr"], conv_bias=P["b_atr"])
    w2, b_out = _fold_bn(P["w2"], P["bn2"], conv_bias=P["b2"])   # (3,3,2*Cout,Cout)
    b_p2 = b_sq + b_ver + b_hor

    # ---- block-Toeplitz weights (stage 1 fused p2||p3; stage 2 over 2*Cout in-ch) --
    taps1 = (
        [(kh - 1, kw - 1, w_sq[kh, kw], 0) for kh in range(3) for kw in range(3)]
        + [(kh - 1, 0, w_ver[kh], 0) for kh in range(3)]
        + [(0, kw - 1, w_hor[kw], 0) for kw in range(3)]
        + [(3 * (kh - 1), 3 * (kw - 1), w_atr[kh, kw], Cout)
           for kh in range(3) for kw in range(3)]
    )
    taps2 = [(kh - 1, kw - 1, w2[kh, kw], 0) for kh in range(3) for kw in range(3)]
    t1 = _toeplitz_stack(taps1, W, Cin, C2, _S1_ROW_OFFSETS).astype(compute_dtype)
    t2 = _toeplitz_stack(taps2, W, C2, Cout, _S2_ROW_OFFSETS).astype(compute_dtype)

    # ---- per-lane bias / PReLU-slope vectors and the per-row validity mask ---------
    b1 = jnp.tile(jnp.concatenate([b_p2, b_p3]), W)[None, :]            # (1, W*2*Cout)
    slope = jnp.tile(jnp.concatenate(
        [jnp.ones((Cout,), jnp.float32),
         jnp.full((Cout,), _PRELU_A, jnp.float32)]), W)[None, :]        # (1, W*2*Cout)
    b2 = jnp.tile(b_out, W)[None, :]                                    # (1, W*Cout)
    rmask = ((jnp.arange(M1) % band) < H).astype(jnp.float32)[:, None]  # (M1, 1)

    # ---- input: NCHW -> lane-dense tall slab (no column padding; only _ROW_PAD zero
    # rows above/below each image so the row-offset slices never cross images).
    # TODO(synk): at production feature-map sizes, build this slab in-kernel from the
    #             unpadded tensor instead of materializing the padded copy in HBM.
    f = jnp.transpose(f_nchw, (0, 2, 3, 1)).reshape(N, H, W * Cin)
    f = jnp.pad(f, ((0, 0), (_ROW_PAD, band - _ROW_PAD - H), (0, 0)))
    f = f.reshape(N * band, W * Cin).astype(compute_dtype)

    kernel = functools.partial(_erf_kernel, H=H, W=W, Cout=Cout, band=band, imgs=B)

    out = pl.pallas_call(
        kernel,
        out_shape=jax.ShapeDtypeStruct((N, H, W * Cout), jnp.float32),
        grid=(N // B,),
        in_specs=[
            pl.BlockSpec((B * band, W * Cin), lambda i: (i, 0)),            # input slab
            pl.BlockSpec((len(_S1_ROW_OFFSETS), W * Cin, W * C2),
                         lambda i: (0, 0, 0)),                              # stage-1 Toeplitz
            pl.BlockSpec((3, W * C2, W * Cout), lambda i: (0, 0, 0)),       # stage-2 Toeplitz
            pl.BlockSpec((1, W * C2), lambda i: (0, 0)),                    # stage-1 bias
            pl.BlockSpec((1, W * C2), lambda i: (0, 0)),                    # PReLU lane slope
            pl.BlockSpec((M1, 1), lambda i: (0, 0)),                        # row validity mask
            pl.BlockSpec((1, W * Cout), lambda i: (0, 0)),                  # stage-2 bias
        ],
        out_specs=pl.BlockSpec((B, H, W * Cout), lambda i: (i, 0, 0)),
        compiler_params=pltpu.CompilerParams(
            dimension_semantics=("parallel",),
            vmem_limit_bytes=32 * 1024 * 1024),
        # TODO(synk): the Toeplitz weights grow O(W^2 * C); at production feature-map
        #             sizes tile W with a grid axis and mark the constant weight specs
        #             pipeline_mode=pl.Buffered(1) before they hit v7x's 64 MiB VMEM.
    )(f, t1, t2, b1, slope, rmask, b2)

    return jnp.transpose(out.reshape(N, H, W, Cout), (0, 3, 1, 2))  # back to NCHW


# -----------------------------------------------------------------------------
# Deterministic synthetic parameters (PyTorch shapes, OIHW)
# -----------------------------------------------------------------------------
def init_params(key, cin, cout):
    ks = jax.random.split(key, 12)

    def w(k, shape, scale=0.1):
        return scale * jax.random.normal(k, shape, jnp.float32)

    def bn(k):
        k1, k2, k3, k4 = jax.random.split(k, 4)
        gamma = 1.0 + 0.1 * jax.random.normal(k1, (cout,), jnp.float32)
        beta = 0.1 * jax.random.normal(k2, (cout,), jnp.float32)
        mean = 0.1 * jax.random.normal(k3, (cout,), jnp.float32)
        var = 1.0 + 0.1 * jnp.abs(jax.random.normal(k4, (cout,), jnp.float32))
        return (gamma, beta, mean, var)

    return dict(
        w_sq=w(ks[0], (cout, cin, 3, 3)), bn_sq=bn(ks[1]),
        w_ver=w(ks[2], (cout, cin, 3, 1)), bn_ver=bn(ks[3]),
        w_hor=w(ks[4], (cout, cin, 1, 3)), bn_hor=bn(ks[5]),
        w_atr=w(ks[6], (cout, cin, 3, 3)), b_atr=w(ks[7], (cout,)),
        bn_atr=bn(ks[8]),
        w2=w(ks[9], (cout, 2 * cout, 3, 3)), b2=w(ks[10], (cout,)),
        bn2=bn(ks[11]),
    )


# -----------------------------------------------------------------------------
# Pure-JAX reference (mirrors the PyTorch forward, inference-mode BN)
# -----------------------------------------------------------------------------
def erf_reference(f, P):
    def conv(x, w, padding, dilation=(1, 1)):
        return jax.lax.conv_general_dilated(
            x, w, (1, 1), padding, rhs_dilation=dilation,
            dimension_numbers=("NCHW", "OIHW", "NCHW"))

    def bn(x, g, b, m, v):
        s = g / jnp.sqrt(v + _EPS)
        return x * s[None, :, None, None] + (b - m * s)[None, :, None, None]

    sq = bn(conv(f, P["w_sq"], ((1, 1), (1, 1))), *P["bn_sq"])
    ver = bn(conv(f, P["w_ver"], ((1, 1), (0, 0))), *P["bn_ver"])
    hor = bn(conv(f, P["w_hor"], ((0, 0), (1, 1))), *P["bn_hor"])
    p2 = sq + ver + hor

    atr = conv(f, P["w_atr"], ((3, 3), (3, 3)), dilation=(3, 3))
    atr = atr + P["b_atr"][None, :, None, None]
    atr = bn(atr, *P["bn_atr"])
    p3 = jnp.where(atr >= 0, atr, _PRELU_A * atr)

    p = jnp.concatenate([p2, p3], axis=1)
    out = conv(p, P["w2"], ((1, 1), (1, 1))) + P["b2"][None, :, None, None]
    out = bn(out, *P["bn2"])
    return jnp.maximum(out, 0.0)


if __name__ == "__main__":
    key = jax.random.PRNGKey(0)
    kx, kp = jax.random.split(key)

    N, Cin, H, W, Cout = 2, 4, 16, 16, 8       # ERF(x=4, y=8)
    x = jax.random.normal(kx, (N, Cin, H, W), jnp.float32)
    params = init_params(kp, Cin, Cout)

    y_ref = erf_reference(x, params)

    # Default (performance) path: bf16 MXU operands, f32 accumulation.
    y = jax.block_until_ready(erf_pallas(x, params))
    assert y.shape == (N, Cout, H, W), y.shape
    err_bf16 = float(jnp.max(jnp.abs(y - y_ref)))
    assert jnp.allclose(y, y_ref, atol=5e-2, rtol=5e-2), f"bf16 max abs err {err_bf16}"

    # Strict-precision path: f32 operands, validates the fused math at 1e-3.
    y32 = jax.block_until_ready(erf_pallas(x, params, compute_dtype=jnp.float32))
    err_f32 = float(jnp.max(jnp.abs(y32 - y_ref)))
    assert jnp.allclose(y32, y_ref, atol=1e-3, rtol=1e-3), f"f32 max abs err {err_f32}"

    print("KERNEL_OK")
</pallas_src>

<mosaic_0001>
module attributes {stable_mosaic.version = 11 : i64} {
  func.func @_erf_kernel(%arg0: i32, %arg1: memref<48x64xbf16, #tpu.memory_space<vmem>>, %arg2: memref<5x64x256xbf16, #tpu.memory_space<vmem>>, %arg3: memref<3x256x128xbf16, #tpu.memory_space<vmem>>, %arg4: memref<1x256xf32, #tpu.memory_space<vmem>>, %arg5: memref<1x256xf32, #tpu.memory_space<vmem>>, %arg6: memref<42x1xf32, #tpu.memory_space<vmem>>, %arg7: memref<1x128xf32, #tpu.memory_space<vmem>>, %arg8: memref<2x16x128xf32, #tpu.memory_space<vmem>>) attributes {dimension_semantics = [#tpu.dimension_semantics<parallel>], iteration_bounds = array<i64: 1>, scalar_prefetch = 0 : i64, scratch_operands = 0 : i64, tpu.core_type = #tpu.core_type<tc>, window_params = [{transform_indices = @transform_0, window_bounds = array<i64: 48, 64>}, {pipeline_mode = #tpu.pipeline_mode<synchronous>, transform_indices = @transform_1, window_bounds = array<i64: 5, 64, 256>}, {pipeline_mode = #tpu.pipeline_mode<synchronous>, transform_indices = @transform_2, window_bounds = array<i64: 3, 256, 128>}, {pipeline_mode = #tpu.pipeline_mode<synchronous>, transform_indices = @transform_3, window_bounds = array<i64: 1, 256>}, {pipeline_mode = #tpu.pipeline_mode<synchronous>, transform_indices = @transform_4, window_bounds = array<i64: 1, 256>}, {pipeline_mode = #tpu.pipeline_mode<synchronous>, transform_indices = @transform_5, window_bounds = array<i64: 42, 1>}, {pipeline_mode = #tpu.pipeline_mode<synchronous>, transform_indices = @transform_6, window_bounds = array<i64: 1, 128>}, {transform_indices = @transform_7, window_bounds = array<i64: 2, 16, 128>}]} {
    %cst = arith.constant 0.000000e+00 : f32
    %0 = vector.broadcast %cst : f32 to vector<42x256xf32>
    %c0 = arith.constant 0 : index
    %c0_0 = arith.constant 0 : index
    %1 = vector.load %arg4[%c0, %c0_0] : memref<1x256xf32, #tpu.memory_space<vmem>>, vector<1x256xf32>
    %2 = vector.broadcast %1 : vector<1x256xf32> to vector<42x256xf32>
    %3 = arith.addf %0, %2 : vector<42x256xf32>
    %c0_1 = arith.constant 0 : index
    %c0_2 = arith.constant 0 : index
    %4 = vector.load %arg1[%c0_1, %c0_2] : memref<48x64xbf16, #tpu.memory_space<vmem>>, vector<42x64xbf16>
    %c0_3 = arith.constant 0 : index
    %c0_4 = arith.constant 0 : index
    %c0_5 = arith.constant 0 : index
    %5 = vector.load %arg2[%c0_3, %c0_4, %c0_5] : memref<5x64x256xbf16, #tpu.memory_space<vmem>>, vector<1x64x256xbf16>
    %6 = vector.shape_cast %5 : vector<1x64x256xbf16> to vector<64x256xbf16>
    %cst_6 = arith.constant dense<0.000000e+00> : vector<42x256xf32>
    %7 = tpu.matmul %4, %6, %cst_6 {dimension_numbers = #tpu.dot_dimension_numbers<[1], [0], [0], [1], [0, 0, 1, 1], [], []>} : vector<42x64xbf16>, vector<64x256xbf16>, vector<42x256xf32> -> vector<42x256xf32>
    %8 = arith.addf %3, %7 : vector<42x256xf32>
    %c2 = arith.constant 2 : index
    %c0_7 = arith.constant 0 : index
    %9 = vector.load %arg1[%c2, %c0_7] : memref<48x64xbf16, #tpu.memory_space<vmem>>, vector<42x64xbf16>
    %c1 = arith.constant 1 : index
    %c0_8 = arith.constant 0 : index
    %c0_9 = arith.constant 0 : index
    %10 = vector.load %arg2[%c1, %c0_8, %c0_9] : memref<5x64x256xbf16, #tpu.memory_space<vmem>>, vector<1x64x256xbf16>
    %11 = vector.shape_cast %10 : vector<1x64x256xbf16> to vector<64x256xbf16>
    %cst_10 = arith.constant dense<0.000000e+00> : vector<42x256xf32>
    %12 = tpu.matmul %9, %11, %cst_10 {dimension_numbers = #tpu.dot_dimension_numbers<[1], [0], [0], [1], [0, 0, 1, 1], [], []>} : vector<42x64xbf16>, vector<64x256xbf16>, vector<42x256xf32> -> vector<42x256xf32>
    %13 = arith.addf %8, %12 : vector<42x256xf32>
    %c3 = arith.constant 3 : index
    %c0_11 = arith.constant 0 : index
    %14 = vector.load %arg1[%c3, %c0_11] : memref<48x64xbf16, #tpu.memory_space<vmem>>, vector<42x64xbf16>
    %c2_12 = arith.constant 2 : index
    %c0_13 = arith.constant 0 : index
    %c0_14 = arith.constant 0 : index
    %15 = vector.load %arg2[%c2_12, %c0_13, %c0_14] : memref<5x64x256xbf16, #tpu.memory_space<vmem>>, vector<1x64x256xbf16>
    %16 = vector.shape_cast %15 : vector<1x64x256xbf16> to vector<64x256xbf16>
    %cst_15 = arith.constant dense<0.000000e+00> : vector<42x256xf32>
    %17 = tpu.matmul %14, %16, %cst_15 {dimension_numbers = #tpu.dot_dimension_numbers<[1], [0], [0], [1], [0, 0, 1, 1], [], []>} : vector<42x64xbf16>, vector<64x256xbf16>, vector<42x256xf32> -> vector<42x256xf32>
    %18 = arith.addf %13, %17 : vector<42x256xf32>
    %c4 = arith.constant 4 : index
    %c0_16 = arith.constant 0 : index
    %19 = vector.load %arg1[%c4, %c0_16] : memref<48x64xbf16, #tpu.memory_space<vmem>>, vector<42x64xbf16>
    %c3_17 = arith.constant 3 : index
    %c0_18 = arith.constant 0 : index
    %c0_19 = arith.constant 0 : index
    %20 = vector.load %arg2[%c3_17, %c0_18, %c0_19] : memref<5x64x256xbf16, #tpu.memory_space<vmem>>, vector<1x64x256xbf16>
    %21 = vector.shape_cast %20 : vector<1x64x256xbf16> to vector<64x256xbf16>
    %cst_20 = arith.constant dense<0.000000e+00> : vector<42x256xf32>
    %22 = tpu.matmul %19, %21, %cst_20 {dimension_numbers = #tpu.dot_dimension_numbers<[1], [0], [0], [1], [0, 0, 1, 1], [], []>} : vector<42x64xbf16>, vector<64x256xbf16>, vector<42x256xf32> -> vector<42x256xf32>
    %23 = arith.addf %18, %22 : vector<42x256xf32>
    %c6 = arith.constant 6 : index
    %c0_21 = arith.constant 0 : index
    %24 = vector.load %arg1[%c6, %c0_21] : memref<48x64xbf16, #tpu.memory_space<vmem>>, vector<42x64xbf16>
    %c4_22 = arith.constant 4 : index
    %c0_23 = arith.constant 0 : index
    %c0_24 = arith.constant 0 : index
    %25 = vector.load %arg2[%c4_22, %c0_23, %c0_24] : memref<5x64x256xbf16, #tpu.memory_space<vmem>>, vector<1x64x256xbf16>
    %26 = vector.shape_cast %25 : vector<1x64x256xbf16> to vector<64x256xbf16>
    %cst_25 = arith.constant dense<0.000000e+00> : vector<42x256xf32>
    %27 = tpu.matmul %24, %26, %cst_25 {dimension_numbers = #tpu.dot_dimension_numbers<[1], [0], [0], [1], [0, 0, 1, 1], [], []>} : vector<42x64xbf16>, vector<64x256xbf16>, vector<42x256xf32> -> vector<42x256xf32>
    %28 = arith.addf %23, %27 : vector<42x256xf32>
    %cst_26 = arith.constant 0.000000e+00 : f32
    %29 = vector.broadcast %cst_26 : f32 to vector<42x256xf32>
    %30 = arith.cmpf oge, %28, %29 : vector<42x256xf32>
    %c0_27 = arith.constant 0 : index
    %c0_28 = arith.constant 0 : index
    %31 = vector.load %arg5[%c0_27, %c0_28] : memref<1x256xf32, #tpu.memory_space<vmem>>, vector<1x256xf32>
    %32 = vector.broadcast %31 : vector<1x256xf32> to vector<42x256xf32>
    %33 = arith.mulf %28, %32 : vector<42x256xf32>
    %34 = arith.select %30, %28, %33 : vector<42x256xi1>, vector<42x256xf32>
    %c0_29 = arith.constant 0 : index
    %c0_30 = arith.constant 0 : index
    %35 = vector.load %arg6[%c0_29, %c0_30] : memref<42x1xf32, #tpu.memory_space<vmem>>, vector<42x1xf32>
    %36 = vector.broadcast %35 : vector<42x1xf32> to vector<42x256xf32>
    %37 = arith.mulf %34, %36 : vector<42x256xf32>
    %38 = arith.truncf %37 : vector<42x256xf32> to vector<42x256xbf16>
    %cst_31 = arith.constant 0.000000e+00 : bf16
    %39 = vector.broadcast %cst_31 : bf16 to vector<1x256xbf16>
    %40 = tpu.concatenate %39, %38, %39 in 0 : vector<1x256xbf16>, vector<42x256xbf16>, vector<1x256xbf16> -> vector<44x256xbf16>
    %cst_32 = arith.constant 0.000000e+00 : f32
    %41 = vector.broadcast %cst_32 : f32 to vector<42x128xf32>
    %c0_33 = arith.constant 0 : index
    %c0_34 = arith.constant 0 : index
    %42 = vector.load %arg7[%c0_33, %c0_34] : memref<1x128xf32, #tpu.memory_space<vmem>>, vector<1x128xf32>
    %43 = vector.broadcast %42 : vector<1x128xf32> to vector<42x128xf32>
    %44 = arith.addf %41, %43 : vector<42x128xf32>
    %45 = vector.extract_strided_slice %40 {offsets = [0, 0], sizes = [42, 256], strides = [1, 1]} : vector<44x256xbf16> to vector<42x256xbf16>
    %c0_35 = arith.constant 0 : index
    %c0_36 = arith.constant 0 : index
    %c0_37 = arith.constant 0 : index
    %46 = vector.load %arg3[%c0_35, %c0_36, %c0_37] : memref<3x256x128xbf16, #tpu.memory_space<vmem>>, vector<1x256x128xbf16>
    %47 = vector.shape_cast %46 : vector<1x256x128xbf16> to vector<256x128xbf16>
    %cst_38 = arith.constant dense<0.000000e+00> : vector<42x128xf32>
    %48 = tpu.matmul %45, %47, %cst_38 {dimension_numbers = #tpu.dot_dimension_numbers<[1], [0], [0], [1], [0, 0, 1, 1], [], []>} : vector<42x256xbf16>, vector<256x128xbf16>, vector<42x128xf32> -> vector<42x128xf32>
    %49 = arith.addf %44, %48 : vector<42x128xf32>
    %50 = vector.extract_strided_slice %40 {offsets = [1, 0], sizes = [42, 256], strides = [1, 1]} : vector<44x256xbf16> to vector<42x256xbf16>
    %c1_39 = arith.constant 1 : index
    %c0_40 = arith.constant 0 : index
    %c0_41 = arith.constant 0 : index
    %51 = vector.load %arg3[%c1_39, %c0_40, %c0_41] : memref<3x256x128xbf16, #tpu.memory_space<vmem>>, vector<1x256x128xbf16>
    %52 = vector.shape_cast %51 : vector<1x256x128xbf16> to vector<256x128xbf16>
    %cst_42 = arith.constant dense<0.000000e+00> : vector<42x128xf32>
    %53 = tpu.matmul %50, %52, %cst_42 {dimension_numbers = #tpu.dot_dimension_numbers<[1], [0], [0], [1], [0, 0, 1, 1], [], []>} : vector<42x256xbf16>, vector<256x128xbf16>, vector<42x128xf32> -> vector<42x128xf32>
    %54 = arith.addf %49, %53 : vector<42x128xf32>
    %55 = vector.extract_strided_slice %40 {offsets = [2, 0], sizes = [42, 256], strides = [1, 1]} : vector<44x256xbf16> to vector<42x256xbf16>
    %c2_43 = arith.constant 2 : index
    %c0_44 = arith.constant 0 : index
    %c0_45 = arith.constant 0 : index
    %56 = vector.load %arg3[%c2_43, %c0_44, %c0_45] : memref<3x256x128xbf16, #tpu.memory_space<vmem>>, vector<1x256x128xbf16>
    %57 = vector.shape_cast %56 : vector<1x256x128xbf16> to vector<256x128xbf16>
    %cst_46 = arith.constant dense<0.000000e+00> : vector<42x128xf32>
    %58 = tpu.matmul %55, %57, %cst_46 {dimension_numbers = #tpu.dot_dimension_numbers<[1], [0], [0], [1], [0, 0, 1, 1], [], []>} : vector<42x256xbf16>, vector<256x128xbf16>, vector<42x128xf32> -> vector<42x128xf32>
    %59 = arith.addf %54, %58 : vector<42x128xf32>
    %cst_47 = arith.constant 0.000000e+00 : f32
    %60 = vector.broadcast %cst_47 : f32 to vector<42x128xf32>
    %61 = arith.maximumf %59, %60 : vector<42x128xf32>
    %62 = vector.extract_strided_slice %61 {offsets = [0, 0], sizes = [16, 128], strides = [1, 1]} : vector<42x128xf32> to vector<16x128xf32>
    %c0_48 = arith.constant 0 : index
    %c0_49 = arith.constant 0 : index
    %c0_50 = arith.constant 0 : index
    %63 = vector.load %arg8[%c0_48, %c0_49, %c0_50] : memref<2x16x128xf32, #tpu.memory_space<vmem>>, vector<1x16x128xf32>
    %64 = vector.shape_cast %63 : vector<1x16x128xf32> to vector<16x128xf32>
    %65 = vector.shape_cast %62 : vector<16x128xf32> to vector<1x16x128xf32>
    tpu.vector_store %arg8[%c0_48, %c0_49, %c0_50], %65 {strides = array<i32>} : memref<2x16x128xf32, #tpu.memory_space<vmem>>, vector<1x16x128xf32>,
    %66 = vector.extract_strided_slice %61 {offsets = [24, 0], sizes = [16, 128], strides = [1, 1]} : vector<42x128xf32> to vector<16x128xf32>
    %c1_51 = arith.constant 1 : index
    %c0_52 = arith.constant 0 : index
    %c0_53 = arith.constant 0 : index
    %67 = vector.load %arg8[%c1_51, %c0_52, %c0_53] : memref<2x16x128xf32, #tpu.memory_space<vmem>>, vector<1x16x128xf32>
    %68 = vector.shape_cast %67 : vector<1x16x128xf32> to vector<16x128xf32>
    %69 = vector.shape_cast %66 : vector<16x128xf32> to vector<1x16x128xf32>
    tpu.vector_store %arg8[%c1_51, %c0_52, %c0_53], %69 {strides = array<i32>} : memref<2x16x128xf32, #tpu.memory_space<vmem>>, vector<1x16x128xf32>,
    return
  }
  func.func @transform_0(%arg0: i32) -> (i32, i32) {
    %c0_i32 = arith.constant 0 : i32
    %c0_i32_0 = arith.constant 0 : i32
    return %arg0, %c0_i32 : i32, i32
  }
  func.func @transform_1(%arg0: i32) -> (i32, i32, i32) {
    %c0_i32 = arith.constant 0 : i32
    %c0_i32_0 = arith.constant 0 : i32
    %c0_i32_1 = arith.constant 0 : i32
    %c0_i32_2 = arith.constant 0 : i32
    return %c0_i32, %c0_i32_0, %c0_i32_1 : i32, i32, i32
  }
  func.func @transform_2(%arg0: i32) -> (i32, i32, i32) {
    %c0_i32 = arith.constant 0 : i32
    %c0_i32_0 = arith.constant 0 : i32
    %c0_i32_1 = arith.constant 0 : i32
    %c0_i32_2 = arith.constant 0 : i32
    return %c0_i32, %c0_i32_0, %c0_i32_1 : i32, i32, i32
  }
  func.func @transform_3(%arg0: i32) -> (i32, i32) {
    %c0_i32 = arith.constant 0 : i32
    %c0_i32_0 = arith.constant 0 : i32
    %c0_i32_1 = arith.constant 0 : i32
    return %c0_i32, %c0_i32_0 : i32, i32
  }
  func.func @transform_4(%arg0: i32) -> (i32, i32) {
    %c0_i32 = arith.constant 0 : i32
    %c0_i32_0 = arith.constant 0 : i32
    %c0_i32_1 = arith.constant 0 : i32
    return %c0_i32, %c0_i32_0 : i32, i32
  }
  func.func @transform_5(%arg0: i32) -> (i32, i32) {
    %c0_i32 = arith.constant 0 : i32
    %c0_i32_0 = arith.constant 0 : i32
    %c0_i32_1 = arith.constant 0 : i32
    return %c0_i32, %c0_i32_0 : i32, i32
  }
  func.func @transform_6(%arg0: i32) -> (i32, i32) {
    %c0_i32 = arith.constant 0 : i32
    %c0_i32_0 = arith.constant 0 : i32
    %c0_i32_1 = arith.constant 0 : i32
    return %c0_i32, %c0_i32_0 : i32, i32
  }
  func.func @transform_7(%arg0: i32) -> (i32, i32, i32) {
    %c0_i32 = arith.constant 0 : i32
    %c0_i32_0 = arith.constant 0 : i32
    %c0_i32_1 = arith.constant 0 : i32
    return %arg0, %c0_i32, %c0_i32_0 : i32, i32, i32
  }
}

</mosaic_0001>

<llo_original>
// kernel: tpu_custom_call.1
$region0: #{tpu_custom_call.1}
  #allocation0 [shape = 'u32[]', space=smem, size = 0x4, offset = 0x4, fixed_abs, tag = 'smem constant byte address 0x4 - core index']
  #allocation1 [shape = 'u32[144,128]{1,0:T(1,128)}', space=vmem, size = 0x12000, scoped, tag = 'internal scratch']
  %s0 = inlined_call_operand.vmem [shape: bf16[48,64], index: 0, kind: input, shape index: {}]
  %s1 = inlined_call_operand.hbm [shape: bf16[5,64,256], index: 1, kind: input, shape index: {}]
  %s2 = inlined_call_operand.hbm [shape: bf16[3,256,128], index: 2, kind: input, shape index: {}]
  %s3 = inlined_call_operand.vmem [shape: f32[1,256], index: 3, kind: input, shape index: {}]
  %s4 = inlined_call_operand.vmem [shape: f32[1,256], index: 4, kind: input, shape index: {}]
  %s5 = inlined_call_operand.vmem [shape: f32[42,1], index: 5, kind: input, shape index: {}]
  %s6 = inlined_call_operand.vmem [shape: f32[1,128], index: 6, kind: input, shape index: {}]
  %s7 = inlined_call_operand.hbm [shape: f32[2,16,128], index: 7, kind: output, shape index: {}]
  %s8 = sld [smem:[#allocation0]]
  $region46: #{tpu_custom_call.1} parent=0
    _
  %s10 = ssub.s32 1, %s8
  %s11 = scalar_select 0, %s10, %s8
  $region1: #{tpu_custom_call.1} parent=0
    #allocation2 [shape = 'u8[163840]{0}', space=vmem, size = 0x28000, scoped, tag = 'input window, operand 1, single buffered']
    #allocation3 [shape = 's32[1]{0}', space=sflag, size = 0x4, scoped, tag = 'scoped memory for tpu_custom_call.1']
    #allocation4 [shape = 's32[1]{0}', space=sflag, size = 0x4, scoped, tag = 'scoped memory for tpu_custom_call.1']
    #allocation5 [shape = 'u8[196608]{0}', space=vmem, size = 0x30000, scoped, tag = 'input window, operand 2, single buffered']
    #allocation6 [shape = 's32[1]{0}', space=sflag, size = 0x4, scoped, tag = 'scoped memory for tpu_custom_call.1']
    #allocation7 [shape = 'u8[16384]{0}', space=vmem, size = 0x4000, scoped, tag = 'output window, operand 0, single buffered']
    %12 = vsyncpa [#allocation3], 0
    %13 = vsyncpa [#allocation6], 0
    %14 = vsyncpa [#allocation4], 0
    // Predicated region
    $region2: #{tpu_custom_call.1} parent=1 // pred_check
      _
    $region3: #{tpu_custom_call.1} parent=1 // pred_check_branch
      %16 = sbr.rel (0) target = $region5
    $region4: #{tpu_custom_call.1} parent=1 // pred_region
      _
    $region5: #{tpu_custom_call.1} parent=1 // pred_fallthru
      _
    // Predicated region
    $region6: #{tpu_custom_call.1} parent=1 // pred_check
      _
    $region7: #{tpu_custom_call.1} parent=1 // pred_check_branch
      %18 = sbr.rel (0) target = $region9
    $region8: #{tpu_custom_call.1} parent=1 // pred_region
      %s20 = ssub.s32 5120, 5120
      %21 = vsyncadd [#allocation3], %s20
      %s22 = sshll.u32 [#allocation2], 4
      %s23 = int_to_ptr.vmem [resolvable:$true] %s22
      %28 = dma.hbm_to_vmem [thread:$0]  %s1, 5120, %s23, [#allocation3], 128, 128, 8
    $region9: #{tpu_custom_call.1} parent=1 // pred_fallthru
      _
    // Predicated region
    $region10: #{tpu_custom_call.1} parent=1 // pred_check
      _
    $region11: #{tpu_custom_call.1} parent=1 // pred_check_branch
      %30 = sbr.rel (0) target = $region13
    $region12: #{tpu_custom_call.1} parent=1 // pred_region
      %s32 = ssub.s32 6144, 6144
      %33 = vsyncadd [#allocation6], %s32
      %s34 = sshll.u32 [#allocation5], 4
      %s35 = int_to_ptr.vmem [resolvable:$true] %s34
      %40 = dma.hbm_to_vmem [thread:$0]  %s2, 6144, %s35, [#allocation6], 64, 64, 4
    $region13: #{tpu_custom_call.1} parent=1 // pred_fallthru
      _
    // Predicated region
    $region14: #{tpu_custom_call.1} parent=1 // pred_check
      _
    $region15: #{tpu_custom_call.1} parent=1 // pred_check_branch
      %42 = sbr.rel (0) target = $region17
    $region16: #{tpu_custom_call.1} parent=1 // pred_region
      _
    $region17: #{tpu_custom_call.1} parent=1 // pred_fallthru
      _
    // Predicated region
    $region18: #{tpu_custom_call.1} parent=1 // pred_check
      _
    $region19: #{tpu_custom_call.1} parent=1 // pred_check_branch
      %44 = sbr.rel (0) target = $region21
    $region20: #{tpu_custom_call.1} parent=1 // pred_region
      _
    $region21: #{tpu_custom_call.1} parent=1 // pred_fallthru
      _
    // Predicated region
    $region22: #{tpu_custom_call.1} parent=1 // pred_check
      _
    $region23: #{tpu_custom_call.1} parent=1 // pred_check_branch
      %46 = sbr.rel (0) target = $region25
    $region24: #{tpu_custom_call.1} parent=1 // pred_region
      _
    $region25: #{tpu_custom_call.1} parent=1 // pred_fallthru
      _
    // Predicated region
    $region26: #{tpu_custom_call.1} parent=1 // pred_check
      _
    $region27: #{tpu_custom_call.1} parent=1 // pred_check_branch
      %48 = sbr.rel (0) target = $region29
    $region28: #{tpu_custom_call.1} parent=1 // pred_region
      _
    $region29: #{tpu_custom_call.1} parent=1 // pred_fallthru
      _
    // Predicated region
    $region30: #{tpu_custom_call.1} parent=1 // pred_check
      _
    $region31: #{tpu_custom_call.1} parent=1 // pred_check_branch
      %50 = sbr.rel (0) target = $region33
    $region32: #{tpu_custom_call.1} parent=1 // pred_region
      %51 = dma.done [#allocation3], 5120
    $region33: #{tpu_custom_call.1} parent=1 // pred_fallthru
      _
    // Predicated region
    $region34: #{tpu_custom_call.1} parent=1 // pred_check
      _
    $region35: #{tpu_custom_call.1} parent=1 // pred_check_branch
      %53 = sbr.rel (0) target = $region37
    $region36: #{tpu_custom_call.1} parent=1 // pred_region
      %54 = dma.done [#allocation6], 6144
    $region37: #{tpu_custom_call.1} parent=1 // pred_fallthru
      _
    %v56 = vld [vmem:[%s3] sm:$0x3]
    %v58 = vlaneseq
    %v59 = vshrl.u32 %v58, 7
    %v60 = vsub.s32 0, %v59
    %v61 = vrot.slane %v56, %v60
    %v62 = vlaneseq
    %v63 = vshrl.u32 %v62, 7
    %v64 = vsub.s32 1, %v63
    %v65 = vrot.slane %v56, %v64
    %v68 = vadd.f32 %v61, 0.0
    %v69 = vadd.f32 %v65, 0.0
    %v70 = vld [vmem:[%s0] sm:$0xf]
    %v71 = vld [vmem:[%s0 + $0x4] sm:$0xf]
    %v72 = vld [vmem:[%s0 + $0x8] sm:$0xf]
    %v73 = vld [vmem:[%s0 + $0xc] sm:$0xf]
    %v74 = vld [vmem:[%s0 + $0x10] sm:$0xf]
    %v75 = vld [vmem:[%s0 + $0x14] sm:$0x1]
    %v76 = vld [vmem:[#allocation2] sm:$0xff]
    %v77 = vld [vmem:[#allocation2 + $0x8] sm:$0xff]
    %v78 = vld [vmem:[#allocation2 + $0x10] sm:$0xff]
    %v79 = vld [vmem:[#allocation2 + $0x18] sm:$0xff]
    %v80 = vld [vmem:[#allocation2 + $0x20] sm:$0xff]
    %v81 = vld [vmem:[#allocation2 + $0x28] sm:$0xff]
    %v82 = vld [vmem:[#allocation2 + $0x30] sm:$0xff]
    %v83 = vld [vmem:[#allocation2 + $0x38] sm:$0xff]
    %v90 = vunpack.c.l.b16 %v70
    %v91 = vunpack.c.l.b16 %v71
    %v92 = vunpack.c.l.b16 %v72
    %v93 = vunpack.c.l.b16 %v73
    %v94 = vunpack.c.l.b16 %v74
    %v95 = vunpack.c.l.b16 %v75
    %v96 = vpack.c.b16 %v91, %v90
    %v97 = vpack.c.b16 %v93, %v92
    %v98 = vpack.c.b16 %v95, %v94
    %v107 = vunpack.c.l.b16 %v76
    %v108 = vunpack.c.h.b16 %v76
    %v109 = vunpack.c.l.b16 %v77
    %v110 = vunpack.c.h.b16 %v77
    %v111 = vunpack.c.l.b16 %v78
    %v112 = vunpack.c.h.b16 %v78
    %v113 = vunpack.c.l.b16 %v79
    %v114 = vunpack.c.h.b16 %v79
    %v115 = vunpack.c.l.b16 %v80
    %v116 = vunpack.c.h.b16 %v80
    %v117 = vunpack.c.l.b16 %v81
    %v118 = vunpack.c.h.b16 %v81
    %v119 = vunpack.c.l.b16 %v82
    %v120 = vunpack.c.h.b16 %v82
    %v121 = vunpack.c.l.b16 %v83
    %v122 = vunpack.c.h.b16 %v83
    %v123 = vpack.c.b16 %v109, %v107
    %v124 = vpack.c.b16 %v110, %v108
    %v125 = vpack.c.b16 %v113, %v111
    %v126 = vpack.c.b16 %v114, %v112
    %v127 = vpack.c.b16 %v117, %v115
    %v128 = vpack.c.b16 %v118, %v116
    %v129 = vpack.c.b16 %v121, %v119
    %v130 = vpack.c.b16 %v122, %v120
    %vm139 = vcmask 523264
    %v141 = vsel %vm139, %v96, 0
    %v144 = vsel %vm139, %v97, 0
    %v147 = vsel %vm139, %v98, 0
    %149 = vmatprep.subr.bf16.mxu0 %v124
    %150 = vmatpush1.bf16.msra.mxu0 %v123
    %151 = vmatprep.subr.bf16.mxu0 %v126
    %152 = vmatpush1.bf16.msra.mxu0 %v125
    %153 = vmatprep.subr.bf16.mxu0 %v128
    %154 = vmatpush1.bf16.msra.mxu0 %v127
    %155 = vmatprep.subr.bf16.mxu0 %v130
    %156 = vmatpush1.bf16.msra.mxu0 %v129
    %157 = vmatprep.subr.bf16.mxu0 0
    %158 = vmatpush1.bf16.msra.mxu0 0
    %159 = vmatprep.subr.bf16.mxu0 0
    %160 = vmatpush1.bf16.msra.mxu0 0
    %161 = vmatprep.subr.bf16.mxu0 0
    %162 = vmatpush1.bf16.msra.mxu0 0
    %163 = vmatprep.subr.bf16.mxu0 0
    %164 = vmatpush1.bf16.msra.mxu0 0
    %165 = vmatprep.subr.bf16.mxu0 0
    %166 = vmatpush1.bf16.msra.mxu0 0
    %167 = vmatprep.subr.bf16.mxu0 0
    %168 = vmatpush1.bf16.msra.mxu0 0
    %169 = vmatprep.subr.bf16.mxu0 0
    %170 = vmatpush1.bf16.msra.mxu0 0
    %171 = vmatprep.subr.bf16.mxu0 0
    %172 = vmatpush1.bf16.msra.mxu0 0
    %173 = vmatprep.subr.bf16.mxu0 0
    %174 = vmatpush1.bf16.msra.mxu0 0
    %175 = vmatprep.subr.bf16.mxu0 0
    %176 = vmatpush1.bf16.msra.mxu0 0
    %177 = vmatprep.subr.bf16.mxu0 0
    %178 = vmatpush1.bf16.msra.mxu0 0
    %179 = vmatprep.subr.bf16.mxu0 0
    %180 = vmatpush1.bf16.msra.mxu0 0
    %181 = vmatprep.mubr.bf16.mxu0 0
    %182 = vmatmul.mubr.bf16.gmra.mrb[0].mxu0 %v141
    %v183 = vpop.f32.mrb[0].mxu0
    %v184 = vadd.f32 0.0, %v183
    %v185 = vpop.f32.mrb[0].mxu0
    %v186 = vadd.f32 0.0, %v185
    %v187 = vpop.f32.mrb[0].mxu0
    %v188 = vadd.f32 0.0, %v187
    %v189 = vpop.f32.mrb[0].mxu0
    %v190 = vadd.f32 0.0, %v189
    %191 = vmatprep.mubr.bf16.mxu0 0
    %192 = vmatmul.mubr.bf16.gmra.mrb[0].mxu0 %v144
    %v193 = vpop.f32.mrb[0].mxu0
    %v194 = vadd.f32 0.0, %v193
    %v195 = vpop.f32.mrb[0].mxu0
    %v196 = vadd.f32 0.0, %v195
    %v197 = vpop.f32.mrb[0].mxu0
    %v198 = vadd.f32 0.0, %v197
    %v199 = vpop.f32.mrb[0].mxu0
    %v200 = vadd.f32 0.0, %v199
    %201 = vmatprep.mubr.bf16.mxu0 0
    %202 = vmatmul.mubr.bf16.gmra.mrb[0].mxu0 %v147
    %v203 = vpop.f32.mrb[0].mxu0
    %v204 = vadd.f32 0.0, %v203
    %v205 = vpop.f32.mrb[0].mxu0
    %v206 = vadd.f32 0.0, %v205
    %v207 = vpop.f32.mrb[0].mxu0
    %v208 = vadd.f32 0.0, %v207
    %v209 = vpop.f32.mrb[0].mxu0
    %v210 = vadd.f32 0.0, %v209
    %211 = vdwg.mxu0
    %v212 = vadd.f32 %v68, %v184
    %v213 = vadd.f32 %v69, %v186
    %v214 = vadd.f32 %v68, %v188
    %v215 = vadd.f32 %v69, %v190
    %v216 = vadd.f32 %v68, %v194
    %v217 = vadd.f32 %v69, %v196
    %v218 = vadd.f32 %v68, %v198
    %v219 = vadd.f32 %v69, %v200
    %v220 = vadd.f32 %v68, %v204
    %v221 = vadd.f32 %v69, %v206
    %v222 = vadd.f32 %v68, %v208
    %v223 = vadd.f32 %v69, %v210
    %v224 = vld [vmem:[%s0] sm:$0xe]
    %v225 = vld [vmem:[%s0 + $0x14] sm:$0x3]
    %s226 = scalar_lea.vmem [#allocation2], 64
    %v227 = vld [vmem:[%s226] sm:$0xff]
    %v228 = vld [vmem:[%s226 + $0x8] sm:$0xff]
    %v229 = vld [vmem:[%s226 + $0x10] sm:$0xff]
    %v230 = vld [vmem:[%s226 + $0x18] sm:$0xff]
    %v231 = vld [vmem:[%s226 + $0x20] sm:$0xff]
    %v232 = vld [vmem:[%s226 + $0x28] sm:$0xff]
    %v233 = vld [vmem:[%s226 + $0x30] sm:$0xff]
    %v234 = vld [vmem:[%s226 + $0x38] sm:$0xff]
    %v237 = vunpack.c.l.b16 %v224
    %v238 = vunpack.c.l.b16 %v225
    %v239 = vpack.c.b16 %v91, %v237
    %v240 = vpack.c.b16 %v238, %v94
    %vm241 = vcmask 1046528
    %v242 = vrot.slane %v239, 1
    %v243 = vrot.slane %v97, 1
    %v244 = vsel %vm241, %v242, %v243
    %v245 = vrot.slane %v240, 1
    %v246 = vsel %vm241, %v243, %v245
    %v255 = vunpack.c.l.b16 %v227
    %v256 = vunpack.c.h.b16 %v227
    %v257 = vunpack.c.l.b16 %v228
    %v258 = vunpack.c.h.b16 %v228
    %v259 = vunpack.c.l.b16 %v229
    %v260 = vunpack.c.h.b16 %v229
    %v261 = vunpack.c.l.b16 %v230
    %v262 = vunpack.c.h.b16 %v230
    %v263 = vunpack.c.l.b16 %v231
    %v264 = vunpack.c.h.b16 %v231
    %v265 = vunpack.c.l.b16 %v232
    %v266 = vunpack.c.h.b16 %v232
    %v267 = vunpack.c.l.b16 %v233
    %v268 = vunpack.c.h.b16 %v233
    %v269 = vunpack.c.l.b16 %v234
    %v270 = vunpack.c.h.b16 %v234
    %v271 = vpack.c.b16 %v257, %v255
    %v272 = vpack.c.b16 %v258, %v256
    %v273 = vpack.c.b16 %v261, %v259
    %v274 = vpack.c.b16 %v262, %v260
    %v275 = vpack.c.b16 %v265, %v263
    %v276 = vpack.c.b16 %v266, %v264
    %v277 = vpack.c.b16 %v269, %v267
    %v278 = vpack.c.b16 %v270, %v268
    %v288 = vsel %vm139, %v244, 0
    %v291 = vsel %vm139, %v246, 0
    %v294 = vsel %vm139, %v245, 0
    %296 = vmatprep.subr.bf16.mxu0 %v272
    %297 = vmatpush1.bf16.msra.mxu0 %v271
    %298 = vmatprep.subr.bf16.mxu0 %v274
    %299 = vmatpush1.bf16.msra.mxu0 %v273
    %300 = vmatprep.subr.bf16.mxu0 %v276
    %301 = vmatpush1.bf16.msra.mxu0 %v275
    %302 = vmatprep.subr.bf16.mxu0 %v278
    %303 = vmatpush1.bf16.msra.mxu0 %v277
    %304 = vmatprep.subr.bf16.mxu0 0
    %305 = vmatpush1.bf16.msra.mxu0 0
    %306 = vmatprep.subr.bf16.mxu0 0
    %307 = vmatpush1.bf16.msra.mxu0 0
    %308 = vmatprep.subr.bf16.mxu0 0
    %309 = vmatpush1.bf16.msra.mxu0 0
    %310 = vmatprep.subr.bf16.mxu0 0
    %311 = vmatpush1.bf16.msra.mxu0 0
    %312 = vmatprep.subr.bf16.mxu0 0
    %313 = vmatpush1.bf16.msra.mxu0 0
    %314 = vmatprep.subr.bf16.mxu0 0
    %315 = vmatpush1.bf16.msra.mxu0 0
    %316 = vmatprep.subr.bf16.mxu0 0
    %317 = vmatpush1.bf16.msra.mxu0 0
    %318 = vmatprep.subr.bf16.mxu0 0
    %319 = vmatpush1.bf16.msra.mxu0 0
    %320 = vmatprep.subr.bf16.mxu0 0
    %321 = vmatpush1.bf16.msra.mxu0 0
    %322 = vmatprep.subr.bf16.mxu0 0
    %323 = vmatpush1.bf16.msra.mxu0 0
    %324 = vmatprep.subr.bf16.mxu0 0
    %325 = vmatpush1.bf16.msra.mxu0 0
    %326 = vmatprep.subr.bf16.mxu0 0
    %327 = vmatpush1.bf16.msra.mxu0 0
    %328 = vmatprep.mubr.bf16.mxu0 0
    %329 = vmatmul.mubr.bf16.gmra.mrb[0].mxu0 %v288
    %v330 = vpop.f32.mrb[0].mxu0
    %v331 = vadd.f32 0.0, %v330
    %v332 = vpop.f32.mrb[0].mxu0
    %v333 = vadd.f32 0.0, %v332
    %v334 = vpop.f32.mrb[0].mxu0
    %v335 = vadd.f32 0.0, %v334
    %v336 = vpop.f32.mrb[0].mxu0
    %v337 = vadd.f32 0.0, %v336
    %338 = vmatprep.mubr.bf16.mxu0 0
    %339 = vmatmul.mubr.bf16.gmra.mrb[0].mxu0 %v291
    %v340 = vpop.f32.mrb[0].mxu0
    %v341 = vadd.f32 0.0, %v340
    %v342 = vpop.f32.mrb[0].mxu0
    %v343 = vadd.f32 0.0, %v342
    %v344 = vpop.f32.mrb[0].mxu0
    %v345 = vadd.f32 0.0, %v344
    %v346 = vpop.f32.mrb[0].mxu0
    %v347 = vadd.f32 0.0, %v346
    %348 = vmatprep.mubr.bf16.mxu0 0
    %349 = vmatmul.mubr.bf16.gmra.mrb[0].mxu0 %v294
    %v350 = vpop.f32.mrb[0].mxu0
    %v351 = vadd.f32 0.0, %v350
    %v352 = vpop.f32.mrb[0].mxu0
    %v353 = vadd.f32 0.0, %v352
    %v354 = vpop.f32.mrb[0].mxu0
    %v355 = vadd.f32 0.0, %v354
    %v356 = vpop.f32.mrb[0].mxu0
    %v357 = vadd.f32 0.0, %v356
    %358 = vdwg.mxu0
    %v359 = vadd.f32 %v212, %v331
    %v360 = vadd.f32 %v213, %v333
    %v361 = vadd.f32 %v214, %v335
    %v362 = vadd.f32 %v215, %v337
    %v363 = vadd.f32 %v216, %v341
    %v364 = vadd.f32 %v217, %v343
    %v365 = vadd.f32 %v218, %v345
    %v366 = vadd.f32 %v219, %v347
    %v367 = vadd.f32 %v220, %v351
    %v368 = vadd.f32 %v221, %v353
    %v369 = vadd.f32 %v222, %v355
    %v370 = vadd.f32 %v223, %v357
    %v371 = vld [vmem:[%s0 + $0x14] sm:$0x7]
    %s372 = scalar_lea.vmem [#allocation2], 128
    %v373 = vld [vmem:[%s372] sm:$0xff]
    %v374 = vld [vmem:[%s372 + $0x8] sm:$0xff]
    %v375 = vld [vmem:[%s372 + $0x10] sm:$0xff]
    %v376 = vld [vmem:[%s372 + $0x18] sm:$0xff]
    %v377 = vld [vmem:[%s372 + $0x20] sm:$0xff]
    %v378 = vld [vmem:[%s372 + $0x28] sm:$0xff]
    %v379 = vld [vmem:[%s372 + $0x30] sm:$0xff]
    %v380 = vld [vmem:[%s372 + $0x38] sm:$0xff]
    %v382 = vunpack.c.l.b16 %v371
    %v383 = vpack.c.b16 %v382, %v94
    %vm384 = vsmask.f32 6400
    %v386 = vshrl.u32 %v239, 16
    %v388 = vrot.slane %v386, 1
    %v389 = vshll.u32 %v239, 16
    %v391 = vrot.slane %v389, 2
    %v392 = vor.u32 %v388, %v391
    %v393 = vshrl.u32 %v97, 16
    %v395 = vrot.slane %v393, 1
    %v396 = vshll.u32 %v97, 16
    %v398 = vrot.slane %v396, 2
    %v399 = vor.u32 %v395, %v398
    %v400 = vsel %vm384, %v392, %v399
    %v402 = vshrl.u32 %v383, 16
    %v404 = vrot.slane %v402, 1
    %v405 = vshll.u32 %v383, 16
    %v407 = vrot.slane %v405, 2
    %v408 = vor.u32 %v404, %v407
    %v409 = vsel %vm384, %v399, %v408
    %v418 = vunpack.c.l.b16 %v373
    %v419 = vunpack.c.h.b16 %v373
    %v420 = vunpack.c.l.b16 %v374
    %v421 = vunpack.c.h.b16 %v374
    %v422 = vunpack.c.l.b16 %v375
    %v423 = vunpack.c.h.b16 %v375
    %v424 = vunpack.c.l.b16 %v376
    %v425 = vunpack.c.h.b16 %v376
    %v426 = vunpack.c.l.b16 %v377
    %v427 = vunpack.c.h.b16 %v377
    %v428 = vunpack.c.l.b16 %v378
    %v429 = vunpack.c.h.b16 %v378
    %v430 = vunpack.c.l.b16 %v379
    %v431 = vunpack.c.h.b16 %v379
    %v432 = vunpack.c.l.b16 %v380
    %v433 = vunpack.c.h.b16 %v380
    %v434 = vpack.c.b16 %v420, %v418
    %v435 = vpack.c.b16 %v421, %v419
    %v436 = vpack.c.b16 %v424, %v422
    %v437 = vpack.c.b16 %v425, %v423
    %v438 = vpack.c.b16 %v428, %v426
    %v439 = vpack.c.b16 %v429, %v427
    %v440 = vpack.c.b16 %v432, %v430
    %v441 = vpack.c.b16 %v433, %v431
    %v451 = vsel %vm139, %v400, 0
    %v454 = vsel %vm139, %v409, 0
    %v457 = vsel %vm139, %v408, 0
    %459 = vmatprep.subr.bf16.mxu0 %v435
    %460 = vmatpush1.bf16.msra.mxu0 %v434
    %461 = vmatprep.subr.bf16.mxu0 %v437
    %462 = vmatpush1.bf16.msra.mxu0 %v436
    %463 = vmatprep.subr.bf16.mxu0 %v439
    %464 = vmatpush1.bf16.msra.mxu0 %v438
    %465 = vmatprep.subr.bf16.mxu0 %v441
    %466 = vmatpush1.bf16.msra.mxu0 %v440
    %467 = vmatprep.subr.bf16.mxu0 0
    %468 = vmatpush1.bf16.msra.mxu0 0
    %469 = vmatprep.subr.bf16.mxu0 0
    %470 = vmatpush1.bf16.msra.mxu0 0
    %471 = vmatprep.subr.bf16.mxu0 0
    %472 = vmatpush1.bf16.msra.mxu0 0
    %473 = vmatprep.subr.bf16.mxu0 0
    %474 = vmatpush1.bf16.msra.mxu0 0
    %475 = vmatprep.subr.bf16.mxu0 0
    %476 = vmatpush1.bf16.msra.mxu0 0
    %477 = vmatprep.subr.bf16.mxu0 0
    %478 = vmatpush1.bf16.msra.mxu0 0
    %479 = vmatprep.subr.bf16.mxu0 0
    %480 = vmatpush1.bf16.msra.mxu0 0
    %481 = vmatprep.subr.bf16.mxu0 0
    %482 = vmatpush1.bf16.msra.mxu0 0
    %483 = vmatprep.subr.bf16.mxu0 0
    %484 = vmatpush1.bf16.msra.mxu0 0
    %485 = vmatprep.subr.bf16.mxu0 0
    %486 = vmatpush1.bf16.msra.mxu0 0
    %487 = vmatprep.subr.bf16.mxu0 0
    %488 = vmatpush1.bf16.msra.mxu0 0
    %489 = vmatprep.subr.bf16.mxu0 0
    %490 = vmatpush1.bf16.msra.mxu0 0
    %491 = vmatprep.mubr.bf16.mxu0 0
    %492 = vmatmul.mubr.bf16.gmra.mrb[0].mxu0 %v451
    %v493 = vpop.f32.mrb[0].mxu0
    %v494 = vadd.f32 0.0, %v493
    %v495 = vpop.f32.mrb[0].mxu0
    %v496 = vadd.f32 0.0, %v495
    %v497 = vpop.f32.mrb[0].mxu0
    %v498 = vadd.f32 0.0, %v497
    %v499 = vpop.f32.mrb[0].mxu0
    %v500 = vadd.f32 0.0, %v499
    %501 = vmatprep.mubr.bf16.mxu0 0
    %502 = vmatmul.mubr.bf16.gmra.mrb[0].mxu0 %v454
    %v503 = vpop.f32.mrb[0].mxu0
    %v504 = vadd.f32 0.0, %v503
    %v505 = vpop.f32.mrb[0].mxu0
    %v506 = vadd.f32 0.0, %v505
    %v507 = vpop.f32.mrb[0].mxu0
    %v508 = vadd.f32 0.0, %v507
    %v509 = vpop.f32.mrb[0].mxu0
    %v510 = vadd.f32 0.0, %v509
    %511 = vmatprep.mubr.bf16.mxu0 0
    %512 = vmatmul.mubr.bf16.gmra.mrb[0].mxu0 %v457
    %v513 = vpop.f32.mrb[0].mxu0
    %v514 = vadd.f32 0.0, %v513
    %v515 = vpop.f32.mrb[0].mxu0
    %v516 = vadd.f32 0.0, %v515
    %v517 = vpop.f32.mrb[0].mxu0
    %v518 = vadd.f32 0.0, %v517
    %v519 = vpop.f32.mrb[0].mxu0
    %v520 = vadd.f32 0.0, %v519
    %521 = vdwg.mxu0
    %v522 = vadd.f32 %v359, %v494
    %v523 = vadd.f32 %v360, %v496
    %v524 = vadd.f32 %v361, %v498
    %v525 = vadd.f32 %v362, %v500
    %v526 = vadd.f32 %v363, %v504
    %v527 = vadd.f32 %v364, %v506
    %v528 = vadd.f32 %v365, %v508
    %v529 = vadd.f32 %v366, %v510
    %v530 = vadd.f32 %v367, %v514
    %v531 = vadd.f32 %v368, %v516
    %v532 = vadd.f32 %v369, %v518
    %v533 = vadd.f32 %v370, %v520
    %v534 = vld [vmem:[%s0] sm:$0xc]
    %s535 = scalar_lea.vmem [#allocation2], 192
    %v536 = vld [vmem:[%s535] sm:$0xff]
    %v537 = vld [vmem:[%s535 + $0x8] sm:$0xff]
    %v538 = vld [vmem:[%s535 + $0x10] sm:$0xff]
    %v539 = vld [vmem:[%s535 + $0x18] sm:$0xff]
    %v540 = vld [vmem:[%s535 + $0x20] sm:$0xff]
    %v541 = vld [vmem:[%s535 + $0x28] sm:$0xff]
    %v542 = vld [vmem:[%s535 + $0x30] sm:$0xff]
    %v543 = vld [vmem:[%s535 + $0x38] sm:$0xff]
    %v545 = vunpack.c.l.b16 %v534
    %v546 = vpack.c.b16 %v91, %v545
    %vm547 = vcmask 1045504
    %v548 = vrot.slane %v546, 2
    %v549 = vrot.slane %v97, 2
    %v550 = vsel %vm547, %v548, %v549
    %v551 = vrot.slane %v383, 2
    %v552 = vsel %vm547, %v549, %v551
    %v561 = vunpack.c.l.b16 %v536
    %v562 = vunpack.c.h.b16 %v536
    %v563 = vunpack.c.l.b16 %v537
    %v564 = vunpack.c.h.b16 %v537
    %v565 = vunpack.c.l.b16 %v538
    %v566 = vunpack.c.h.b16 %v538
    %v567 = vunpack.c.l.b16 %v539
    %v568 = vunpack.c.h.b16 %v539
    %v569 = vunpack.c.l.b16 %v540
    %v570 = vunpack.c.h.b16 %v540
    %v571 = vunpack.c.l.b16 %v541
    %v572 = vunpack.c.h.b16 %v541
    %v573 = vunpack.c.l.b16 %v542
    %v574 = vunpack.c.h.b16 %v542
    %v575 = vunpack.c.l.b16 %v543
    %v576 = vunpack.c.h.b16 %v543
    %v577 = vpack.c.b16 %v563, %v561
    %v578 = vpack.c.b16 %v564, %v562
    %v579 = vpack.c.b16 %v567, %v565
    %v580 = vpack.c.b16 %v568, %v566
    %v581 = vpack.c.b16 %v571, %v569
    %v582 = vpack.c.b16 %v572, %v570
    %v583 = vpack.c.b16 %v575, %v573
    %v584 = vpack.c.b16 %v576, %v574
    %v594 = vsel %vm139, %v550, 0
    %v597 = vsel %vm139, %v552, 0
    %v600 = vsel %vm139, %v551, 0
    %602 = vmatprep.subr.bf16.mxu0 %v578
    %603 = vmatpush1.bf16.msra.mxu0 %v577
    %604 = vmatprep.subr.bf16.mxu0 %v580
    %605 = vmatpush1.bf16.msra.mxu0 %v579
    %606 = vmatprep.subr.bf16.mxu0 %v582
    %607 = vmatpush1.bf16.msra.mxu0 %v581
    %608 = vmatprep.subr.bf16.mxu0 %v584
    %609 = vmatpush1.bf16.msra.mxu0 %v583
    %610 = vmatprep.subr.bf16.mxu0 0
    %611 = vmatpush1.bf16.msra.mxu0 0
    %612 = vmatprep.subr.bf16.mxu0 0
    %613 = vmatpush1.bf16.msra.mxu0 0
    %614 = vmatprep.subr.bf16.mxu0 0
    %615 = vmatpush1.bf16.msra.mxu0 0
    %616 = vmatprep.subr.bf16.mxu0 0
    %617 = vmatpush1.bf16.msra.mxu0 0
    %618 = vmatprep.subr.bf16.mxu0 0
    %619 = vmatpush1.bf16.msra.mxu0 0
    %620 = vmatprep.subr.bf16.mxu0 0
    %621 = vmatpush1.bf16.msra.mxu0 0
    %622 = vmatprep.subr.bf16.mxu0 0
    %623 = vmatpush1.bf16.msra.mxu0 0
    %624 = vmatprep.subr.bf16.mxu0 0
    %625 = vmatpush1.bf16.msra.mxu0 0
    %626 = vmatprep.subr.bf16.mxu0 0
    %627 = vmatpush1.bf16.msra.mxu0 0
    %628 = vmatprep.subr.bf16.mxu0 0
    %629 = vmatpush1.bf16.msra.mxu0 0
    %630 = vmatprep.subr.bf16.mxu0 0
    %631 = vmatpush1.bf16.msra.mxu0 0
    %632 = vmatprep.subr.bf16.mxu0 0
    %633 = vmatpush1.bf16.msra.mxu0 0
    %634 = vmatprep.mubr.bf16.mxu0 0
    %635 = vmatmul.mubr.bf16.gmra.mrb[0].mxu0 %v594
    %v636 = vpop.f32.mrb[0].mxu0
    %v637 = vadd.f32 0.0, %v636
    %v638 = vpop.f32.mrb[0].mxu0
    %v639 = vadd.f32 0.0, %v638
    %v640 = vpop.f32.mrb[0].mxu0
    %v641 = vadd.f32 0.0, %v640
    %v642 = vpop.f32.mrb[0].mxu0
    %v643 = vadd.f32 0.0, %v642
    %644 = vmatprep.mubr.bf16.mxu0 0
    %645 = vmatmul.mubr.bf16.gmra.mrb[0].mxu0 %v597
    %v646 = vpop.f32.mrb[0].mxu0
    %v647 = vadd.f32 0.0, %v646
    %v648 = vpop.f32.mrb[0].mxu0
    %v649 = vadd.f32 0.0, %v648
    %v650 = vpop.f32.mrb[0].mxu0
    %v651 = vadd.f32 0.0, %v650
    %v652 = vpop.f32.mrb[0].mxu0
    %v653 = vadd.f32 0.0, %v652
    %654 = vmatprep.mubr.bf16.mxu0 0
    %655 = vmatmul.mubr.bf16.gmra.mrb[0].mxu0 %v600
    %v656 = vpop.f32.mrb[0].mxu0
    %v657 = vadd.f32 0.0, %v656
    %v658 = vpop.f32.mrb[0].mxu0
    %v659 = vadd.f32 0.0, %v658
    %v660 = vpop.f32.mrb[0].mxu0
    %v661 = vadd.f32 0.0, %v660
    %v662 = vpop.f32.mrb[0].mxu0
    %v663 = vadd.f32 0.0, %v662
    %664 = vdwg.mxu0
    %v665 = vadd.f32 %v522, %v637
    %v666 = vadd.f32 %v523, %v639
    %v667 = vadd.f32 %v524, %v641
    %v668 = vadd.f32 %v525, %v643
    %v669 = vadd.f32 %v526, %v647
    %v670 = vadd.f32 %v527, %v649
    %v671 = vadd.f32 %v528, %v651
    %v672 = vadd.f32 %v529, %v653
    %v673 = vadd.f32 %v530, %v657
    %v674 = vadd.f32 %v531, %v659
    %v675 = vadd.f32 %v532, %v661
    %v676 = vadd.f32 %v533, %v663
    %v677 = vld [vmem:[%s0] sm:$0x8]
    %v678 = vld [vmem:[%s0 + $0x14] sm:$0xf]
    %s679 = scalar_lea.vmem [#allocation2], 256
    %v680 = vld [vmem:[%s679] sm:$0xff]
    %v681 = vld [vmem:[%s679 + $0x8] sm:$0xff]
    %v682 = vld [vmem:[%s679 + $0x10] sm:$0xff]
    %v683 = vld [vmem:[%s679 + $0x18] sm:$0xff]
    %v684 = vld [vmem:[%s679 + $0x20] sm:$0xff]
    %v685 = vld [vmem:[%s679 + $0x28] sm:$0xff]
    %v686 = vld [vmem:[%s679 + $0x30] sm:$0xff]
    %v687 = vld [vmem:[%s679 + $0x38] sm:$0xff]
    %v690 = vunpack.c.l.b16 %v677
    %v691 = vunpack.c.l.b16 %v678
    %v692 = vpack.c.b16 %v91, %v690
    %v693 = vpack.c.b16 %v691, %v94
    %vm694 = vcmask 1044480
    %v695 = vrot.slane %v692, 3
    %v696 = vrot.slane %v97, 3
    %v697 = vsel %vm694, %v695, %v696
    %v698 = vrot.slane %v693, 3
    %v699 = vsel %vm694, %v696, %v698
    %v708 = vunpack.c.l.b16 %v680
    %v709 = vunpack.c.h.b16 %v680
    %v710 = vunpack.c.l.b16 %v681
    %v711 = vunpack.c.h.b16 %v681
    %v712 = vunpack.c.l.b16 %v682
    %v713 = vunpack.c.h.b16 %v682
    %v714 = vunpack.c.l.b16 %v683
    %v715 = vunpack.c.h.b16 %v683
    %v716 = vunpack.c.l.b16 %v684
    %v717 = vunpack.c.h.b16 %v684
    %v718 = vunpack.c.l.b16 %v685
    %v719 = vunpack.c.h.b16 %v685
    %v720 = vunpack.c.l.b16 %v686
    %v721 = vunpack.c.h.b16 %v686
    %v722 = vunpack.c.l.b16 %v687
    %v723 = vunpack.c.h.b16 %v687
    %v724 = vpack.c.b16 %v710, %v708
    %v725 = vpack.c.b16 %v711, %v709
    %v726 = vpack.c.b16 %v714, %v712
    %v727 = vpack.c.b16 %v715, %v713
    %v728 = vpack.c.b16 %v718, %v716
    %v729 = vpack.c.b16 %v719, %v717
    %v730 = vpack.c.b16 %v722, %v720
    %v731 = vpack.c.b16 %v723, %v721
    %v741 = vsel %vm139, %v697, 0
    %v744 = vsel %vm139, %v699, 0
    %v747 = vsel %vm139, %v698, 0
    %749 = vmatprep.subr.bf16.mxu0 %v725
    %750 = vmatpush1.bf16.msra.mxu0 %v724
    %751 = vmatprep.subr.bf16.mxu0 %v727
    %752 = vmatpush1.bf16.msra.mxu0 %v726
    %753 = vmatprep.subr.bf16.mxu0 %v729
    %754 = vmatpush1.bf16.msra.mxu0 %v728
    %755 = vmatprep.subr.bf16.mxu0 %v731
    %756 = vmatpush1.bf16.msra.mxu0 %v730
    %757 = vmatprep.subr.bf16.mxu0 0
    %758 = vmatpush1.bf16.msra.mxu0 0
    %759 = vmatprep.subr.bf16.mxu0 0
    %760 = vmatpush1.bf16.msra.mxu0 0
    %761 = vmatprep.subr.bf16.mxu0 0
    %762 = vmatpush1.bf16.msra.mxu0 0
    %763 = vmatprep.subr.bf16.mxu0 0
    %764 = vmatpush1.bf16.msra.mxu0 0
    %765 = vmatprep.subr.bf16.mxu0 0
    %766 = vmatpush1.bf16.msra.mxu0 0
    %767 = vmatprep.subr.bf16.mxu0 0
    %768 = vmatpush1.bf16.msra.mxu0 0
    %769 = vmatprep.subr.bf16.mxu0 0
    %770 = vmatpush1.bf16.msra.mxu0 0
    %771 = vmatprep.subr.bf16.mxu0 0
    %772 = vmatpush1.bf16.msra.mxu0 0
    %773 = vmatprep.subr.bf16.mxu0 0
    %774 = vmatpush1.bf16.msra.mxu0 0
    %775 = vmatprep.subr.bf16.mxu0 0
    %776 = vmatpush1.bf16.msra.mxu0 0
    %777 = vmatprep.subr.bf16.mxu0 0
    %778 = vmatpush1.bf16.msra.mxu0 0
    %779 = vmatprep.subr.bf16.mxu0 0
    %780 = vmatpush1.bf16.msra.mxu0 0
    %781 = vmatprep.mubr.bf16.mxu0 0
    %782 = vmatmul.mubr.bf16.gmra.mrb[0].mxu0 %v741
    %v783 = vpop.f32.mrb[0].mxu0
    %v784 = vadd.f32 0.0, %v783
    %v785 = vpop.f32.mrb[0].mxu0
    %v786 = vadd.f32 0.0, %v785
    %v787 = vpop.f32.mrb[0].mxu0
    %v788 = vadd.f32 0.0, %v787
    %v789 = vpop.f32.mrb[0].mxu0
    %v790 = vadd.f32 0.0, %v789
    %791 = vmatprep.mubr.bf16.mxu0 0
    %792 = vmatmul.mubr.bf16.gmra.mrb[0].mxu0 %v744
    %v793 = vpop.f32.mrb[0].mxu0
    %v794 = vadd.f32 0.0, %v793
    %v795 = vpop.f32.mrb[0].mxu0
    %v796 = vadd.f32 0.0, %v795
    %v797 = vpop.f32.mrb[0].mxu0
    %v798 = vadd.f32 0.0, %v797
    %v799 = vpop.f32.mrb[0].mxu0
    %v800 = vadd.f32 0.0, %v799
    %801 = vmatprep.mubr.bf16.mxu0 0
    %802 = vmatmul.mubr.bf16.gmra.mrb[0].mxu0 %v747
    %v803 = vpop.f32.mrb[0].mxu0
    %v804 = vadd.f32 0.0, %v803
    %v805 = vpop.f32.mrb[0].mxu0
    %v806 = vadd.f32 0.0, %v805
    %v807 = vpop.f32.mrb[0].mxu0
    %v808 = vadd.f32 0.0, %v807
    %v809 = vpop.f32.mrb[0].mxu0
    %v810 = vadd.f32 0.0, %v809
    %811 = vdwg.mxu0
    %v812 = vadd.f32 %v665, %v784
    %v813 = vadd.f32 %v666, %v786
    %v814 = vadd.f32 %v667, %v788
    %v815 = vadd.f32 %v668, %v790
    %v816 = vadd.f32 %v669, %v794
    %v817 = vadd.f32 %v670, %v796
    %v818 = vadd.f32 %v671, %v798
    %v819 = vadd.f32 %v672, %v800
    %v820 = vadd.f32 %v673, %v804
    %v821 = vadd.f32 %v674, %v806
    %v822 = vadd.f32 %v675, %v808
    %v823 = vadd.f32 %v676, %v810
    %vm824 = vcmp.ge.f32.partialorder %v812, 0.0
    %vm825 = vcmp.ge.f32.partialorder %v813, 0.0
    %vm826 = vcmp.ge.f32.partialorder %v814, 0.0
    %vm827 = vcmp.ge.f32.partialorder %v815, 0.0
    %vm828 = vcmp.ge.f32.partialorder %v816, 0.0
    %vm829 = vcmp.ge.f32.partialorder %v817, 0.0
    %vm830 = vcmp.ge.f32.partialorder %v818, 0.0
    %vm831 = vcmp.ge.f32.partialorder %v819, 0.0
    %vm832 = vcmp.ge.f32.partialorder %v820, 0.0
    %vm833 = vcmp.ge.f32.partialorder %v821, 0.0
    %vm834 = vcmp.ge.f32.partialorder %v822, 0.0
    %vm835 = vcmp.ge.f32.partialorder %v823, 0.0
    %v836 = vld [vmem:[%s4] sm:$0x3]
    %v838 = vlaneseq
    %v839 = vshrl.u32 %v838, 7
    %v840 = vsub.s32 0, %v839
    %v841 = vrot.slane %v836, %v840
    %v842 = vlaneseq
    %v843 = vshrl.u32 %v842, 7
    %v844 = vsub.s32 1, %v843
    %v845 = vrot.slane %v836, %v844
    %v848 = vmul.f32 %v812, %v841
    %v849 = vmul.f32 %v813, %v845
    %v850 = vmul.f32 %v814, %v841
    %v851 = vmul.f32 %v815, %v845
    %v852 = vmul.f32 %v816, %v841
    %v853 = vmul.f32 %v817, %v845
    %v854 = vmul.f32 %v818, %v841
    %v855 = vmul.f32 %v819, %v845
    %v856 = vmul.f32 %v820, %v841
    %v857 = vmul.f32 %v821, %v845
    %v858 = vmul.f32 %v822, %v841
    %v859 = vmul.f32 %v823, %v845
    %v860 = vsel %vm824, %v812, %v848
    %v861 = vsel %vm825, %v813, %v849
    %v862 = vsel %vm826, %v814, %v850
    %v863 = vsel %vm827, %v815, %v851
    %v864 = vsel %vm828, %v816, %v852
    %v865 = vsel %vm829, %v817, %v853
    %v866 = vsel %vm830, %v818, %v854
    %v867 = vsel %vm831, %v819, %v855
    %v868 = vsel %vm832, %v820, %v856
    %v869 = vsel %vm833, %v821, %v857
    %v870 = vsel %vm834, %v822, %v858
    %v871 = vsel %vm835, %v823, %v859
    %v872 = vld [vmem:[%s5] sm:$0xff]
    %v873 = vld [vmem:[%s5 + $0x8] sm:$0xff]
    %v874 = vld [vmem:[%s5 + $0x10] sm:$0xff]
    %v875 = vld [vmem:[%s5 + $0x18] sm:$0xff]
    %v876 = vld [vmem:[%s5 + $0x20] sm:$0xff]
    %v877 = vld [vmem:[%s5 + $0x28] sm:$0x3]
    %879 = vset.pattern.permute.xlu0 0
    %880 = vperm.xlu0 %879, %v872
    %v881 = vpop.permute.xlu0 %880
    %884 = vset.pattern.permute.xlu0 0
    %885 = vperm.xlu0 %884, %v873
    %v886 = vpop.permute.xlu0 %885
    %889 = vset.pattern.permute.xlu0 0
    %890 = vperm.xlu0 %889, %v874
    %v891 = vpop.permute.xlu0 %890
    %894 = vset.pattern.permute.xlu0 0
    %895 = vperm.xlu0 %894, %v875
    %v896 = vpop.permute.xlu0 %895
    %899 = vset.pattern.permute.xlu0 0
    %900 = vperm.xlu0 %899, %v876
    %v901 = vpop.permute.xlu0 %900
    %904 = vset.pattern.permute.xlu0 0
    %905 = vperm.xlu0 %904, %v877
    %v906 = vpop.permute.xlu0 %905
    %v908 = vmul.f32 %v860, %v881
    %v909 = vmul.f32 %v861, %v881
    %v910 = vmul.f32 %v862, %v886
    %v911 = vmul.f32 %v863, %v886
    %v912 = vmul.f32 %v864, %v891
    %v913 = vmul.f32 %v865, %v891
    %v914 = vmul.f32 %v866, %v896
    %v915 = vmul.f32 %v867, %v896
    %v916 = vmul.f32 %v868, %v901
    %v917 = vmul.f32 %v869, %v901
    %v918 = vmul.f32 %v870, %v906
    %v919 = vmul.f32 %v871, %v906
    %v920 = vpack.c.bf16 %v910, %v908
    %v921 = vpack.c.bf16 %v911, %v909
    %v922 = vpack.c.bf16 %v914, %v912
    %v923 = vpack.c.bf16 %v915, %v913
    %v924 = vpack.c.bf16 %v918, %v916
    %v925 = vpack.c.bf16 %v919, %v917
    %vm926 = vsmask.f32 256
    %v928 = vshrl.u32 %v920, 16
    %v930 = vrot.slane %v928, 7
    %v931 = vshll.u32 %v920, 16
    %v933 = vor.u32 %v930, %v931
    %v935 = vshrl.u32 %v921, 16
    %v937 = vrot.slane %v935, 7
    %v938 = vshll.u32 %v921, 16
    %v940 = vor.u32 %v937, %v938
    %v942 = vshrl.u32 %v922, 16
    %v944 = vrot.slane %v942, 7
    %v945 = vshll.u32 %v922, 16
    %v947 = vor.u32 %v944, %v945
    %v948 = vsel %vm926, %v930, %v947
    %v950 = vshrl.u32 %v923, 16
    %v952 = vrot.slane %v950, 7
    %v953 = vshll.u32 %v923, 16
    %v955 = vor.u32 %v952, %v953
    %v956 = vsel %vm926, %v937, %v955
    %v958 = vshrl.u32 %v924, 16
    %v960 = vrot.slane %v958, 7
    %v961 = vshll.u32 %v924, 16
    %v963 = vor.u32 %v960, %v961
    %v964 = vsel %vm926, %v944, %v963
    %v966 = vshrl.u32 %v925, 16
    %v968 = vrot.slane %v966, 7
    %v969 = vshll.u32 %v925, 16
    %v971 = vor.u32 %v968, %v969
    %v972 = vsel %vm926, %v952, %v971
    %vm979 = vcmask 1040384
    %vm980 = vmand %vm979, %vm926
    %v981 = vsel %vm980, 0, %v933
    %v982 = vsel %vm980, 0, %v940
    %vm983 = vsmask.f32 5376
    %vm984 = vmand %vm547, %vm983
    %v985 = vsel %vm984, %v964, 0
    %v986 = vsel %vm984, %v972, 0
    %v987 = vld [vmem:[%s6] sm:$0x1]
    %v989 = vlaneseq
    %v990 = vshrl.u32 %v989, 7
    %v991 = vsub.s32 0, %v990
    %v992 = vrot.slane %v987, %v991
    %v994 = vadd.f32 %v992, 0.0
    %v995 = vld [vmem:[#allocation5] sm:$0xf]
    %v996 = vld [vmem:[#allocation5 + $0x4] sm:$0xf]
    %v997 = vld [vmem:[#allocation5 + $0x8] sm:$0xf]
    %v998 = vld [vmem:[#allocation5 + $0xc] sm:$0xf]
    %v999 = vld [vmem:[#allocation5 + $0x10] sm:$0xf]
    %v1000 = vld [vmem:[#allocation5 + $0x14] sm:$0xf]
    %v1001 = vld [vmem:[#allocation5 + $0x18] sm:$0xf]
    %v1002 = vld [vmem:[#allocation5 + $0x1c] sm:$0xf]
    %v1003 = vld [vmem:[#allocation5 + $0x20] sm:$0xf]
    %v1004 = vld [vmem:[#allocation5 + $0x24] sm:$0xf]
    %v1005 = vld [vmem:[#allocation5 + $0x28] sm:$0xf]
    %v1006 = vld [vmem:[#allocation5 + $0x2c] sm:$0xf]
    %v1007 = vld [vmem:[#allocation5 + $0x30] sm:$0xf]
    %v1008 = vld [vmem:[#allocation5 + $0x34] sm:$0xf]
    %v1009 = vld [vmem:[#allocation5 + $0x38] sm:$0xf]
    %v1010 = vld [vmem:[#allocation5 + $0x3c] sm:$0xf]
    %v1011 = vld [vmem:[#allocation5 + $0x40] sm:$0xf]
    %v1012 = vld [vmem:[#allocation5 + $0x44] sm:$0xf]
    %v1013 = vld [vmem:[#allocation5 + $0x48] sm:$0xf]
    %v1014 = vld [vmem:[#allocation5 + $0x4c] sm:$0xf]
    %v1015 = vld [vmem:[#allocation5 + $0x50] sm:$0xf]
    %v1016 = vld [vmem:[#allocation5 + $0x54] sm:$0xf]
    %v1017 = vld [vmem:[#allocation5 + $0x58] sm:$0xf]
    %v1018 = vld [vmem:[#allocation5 + $0x5c] sm:$0xf]
    %v1019 = vld [vmem:[#allocation5 + $0x60] sm:$0xf]
    %v1020 = vld [vmem:[#allocation5 + $0x64] sm:$0xf]
    %v1021 = vld [vmem:[#allocation5 + $0x68] sm:$0xf]
    %v1022 = vld [vmem:[#allocation5 + $0x6c] sm:$0xf]
    %v1023 = vld [vmem:[#allocation5 + $0x70] sm:$0xf]
    %v1024 = vld [vmem:[#allocation5 + $0x74] sm:$0xf]
    %v1025 = vld [vmem:[#allocation5 + $0x78] sm:$0xf]
    %v1026 = vld [vmem:[#allocation5 + $0x7c] sm:$0xf]
    %v1059 = vunpack.c.l.b16 %v995
    %v1060 = vunpack.c.l.b16 %v996
    %v1061 = vunpack.c.l.b16 %v997
    %v1062 = vunpack.c.l.b16 %v998
    %v1063 = vunpack.c.l.b16 %v999
    %v1064 = vunpack.c.l.b16 %v1000
    %v1065 = vunpack.c.l.b16 %v1001
    %v1066 = vunpack.c.l.b16 %v1002
    %v1067 = vunpack.c.l.b16 %v1003
    %v1068 = vunpack.c.l.b16 %v1004
    %v1069 = vunpack.c.l.b16 %v1005
    %v1070 = vunpack.c.l.b16 %v1006
    %v1071 = vunpack.c.l.b16 %v1007
    %v1072 = vunpack.c.l.b16 %v1008
    %v1073 = vunpack.c.l.b16 %v1009
    %v1074 = vunpack.c.l.b16 %v1010
    %v1075 = vunpack.c.l.b16 %v1011
    %v1076 = vunpack.c.l.b16 %v1012
    %v1077 = vunpack.c.l.b16 %v1013
    %v1078 = vunpack.c.l.b16 %v1014
    %v1079 = vunpack.c.l.b16 %v1015
    %v1080 = vunpack.c.l.b16 %v1016
    %v1081 = vunpack.c.l.b16 %v1017
    %v1082 = vunpack.c.l.b16 %v1018
    %v1083 = vunpack.c.l.b16 %v1019
    %v1084 = vunpack.c.l.b16 %v1020
    %v1085 = vunpack.c.l.b16 %v1021
    %v1086 = vunpack.c.l.b16 %v1022
    %v1087 = vunpack.c.l.b16 %v1023
    %v1088 = vunpack.c.l.b16 %v1024
    %v1089 = vunpack.c.l.b16 %v1025
    %v1090 = vunpack.c.l.b16 %v1026
    %v1091 = vpack.c.b16 %v1060, %v1059
    %v1092 = vpack.c.b16 %v1062, %v1061
    %v1093 = vpack.c.b16 %v1064, %v1063
    %v1094 = vpack.c.b16 %v1066, %v1065
    %v1095 = vpack.c.b16 %v1068, %v1067
    %v1096 = vpack.c.b16 %v1070, %v1069
    %v1097 = vpack.c.b16 %v1072, %v1071
    %v1098 = vpack.c.b16 %v1074, %v1073
    %v1099 = vpack.c.b16 %v1076, %v1075
    %v1100 = vpack.c.b16 %v1078, %v1077
    %v1101 = vpack.c.b16 %v1080, %v1079
    %v1102 = vpack.c.b16 %v1082, %v1081
    %v1103 = vpack.c.b16 %v1084, %v1083
    %v1104 = vpack.c.b16 %v1086, %v1085
    %v1105 = vpack.c.b16 %v1088, %v1087
    %v1106 = vpack.c.b16 %v1090, %v1089
    %1123 = vmatprep.subr.bf16.mxu0 0
    %1124 = vmatpush1.bf16.msra.mxu0 %v1091
    %1125 = vmatprep.subr.bf16.mxu0 0
    %1126 = vmatpush1.bf16.msra.mxu0 %v1092
    %1127 = vmatprep.subr.bf16.mxu0 0
    %1128 = vmatpush1.bf16.msra.mxu0 %v1093
    %1129 = vmatprep.subr.bf16.mxu0 0
    %1130 = vmatpush1.bf16.msra.mxu0 %v1094
    %1131 = vmatprep.subr.bf16.mxu0 0
    %1132 = vmatpush1.bf16.msra.mxu0 %v1095
    %1133 = vmatprep.subr.bf16.mxu0 0
    %1134 = vmatpush1.bf16.msra.mxu0 %v1096
    %1135 = vmatprep.subr.bf16.mxu0 0
    %1136 = vmatpush1.bf16.msra.mxu0 %v1097
    %1137 = vmatprep.subr.bf16.mxu0 0
    %1138 = vmatpush1.bf16.msra.mxu0 %v1098
    %1139 = vmatprep.subr.bf16.mxu0 0
    %1140 = vmatpush1.bf16.msra.mxu0 %v1099
    %1141 = vmatprep.subr.bf16.mxu0 0
    %1142 = vmatpush1.bf16.msra.mxu0 %v1100
    %1143 = vmatprep.subr.bf16.mxu0 0
    %1144 = vmatpush1.bf16.msra.mxu0 %v1101
    %1145 = vmatprep.subr.bf16.mxu0 0
    %1146 = vmatpush1.bf16.msra.mxu0 %v1102
    %1147 = vmatprep.subr.bf16.mxu0 0
    %1148 = vmatpush1.bf16.msra.mxu0 %v1103
    %1149 = vmatprep.subr.bf16.mxu0 0
    %1150 = vmatpush1.bf16.msra.mxu0 %v1104
    %1151 = vmatprep.subr.bf16.mxu0 0
    %1152 = vmatpush1.bf16.msra.mxu0 %v1105
    %1153 = vmatprep.subr.bf16.mxu0 0
    %1154 = vmatpush1.bf16.msra.mxu0 %v1106
    %1155 = vmatprep.mubr.bf16.mxu0 %v982
    %1156 = vmatmul.mubr.bf16.gmra.mrb[0].mxu0 %v981
    %v1157 = vpop.f32.mrb[0].mxu0
    %v1158 = vadd.f32 0.0, %v1157
    %v1159 = vpop.f32.mrb[0].mxu0
    %v1160 = vpop.f32.mrb[0].mxu0
    %v1161 = vadd.f32 0.0, %v1160
    %v1162 = vpop.f32.mrb[0].mxu0
    %1163 = vmatprep.mubr.bf16.mxu0 %v956
    %1164 = vmatmul.mubr.bf16.gmra.mrb[0].mxu0 %v948
    %v1165 = vpop.f32.mrb[0].mxu0
    %v1166 = vpop.f32.mrb[0].mxu0
    %v1167 = vpop.f32.mrb[0].mxu0
    %v1168 = vadd.f32 0.0, %v1167
    %v1169 = vpop.f32.mrb[0].mxu0
    %1170 = vmatprep.mubr.bf16.mxu0 %v986
    %1171 = vmatmul.mubr.bf16.gmra.mrb[0].mxu0 %v985
    %v1172 = vpop.f32.mrb[0].mxu0
    %v1173 = vadd.f32 0.0, %v1172
    %v1174 = vpop.f32.mrb[0].mxu0
    %v1175 = vpop.f32.mrb[0].mxu0
    %v1176 = vpop.f32.mrb[0].mxu0
    %1177 = vdwg.mxu0
    %v1178 = vadd.f32 %v994, %v1158
    %v1179 = vadd.f32 %v994, %v1161
    %v1180 = vadd.f32 %v994, %v1168
    %v1181 = vadd.f32 %v994, %v1173
    %s1182 = scalar_lea.vmem [#allocation5], 128
    %v1183 = vld [vmem:[%s1182] sm:$0xf]
    %v1184 = vld [vmem:[%s1182 + $0x4] sm:$0xf]
    %v1185 = vld [vmem:[%s1182 + $0x8] sm:$0xf]
    %v1186 = vld [vmem:[%s1182 + $0xc] sm:$0xf]
    %v1187 = vld [vmem:[%s1182 + $0x10] sm:$0xf]
    %v1188 = vld [vmem:[%s1182 + $0x14] sm:$0xf]
    %v1189 = vld [vmem:[%s1182 + $0x18] sm:$0xf]
    %v1190 = vld [vmem:[%s1182 + $0x1c] sm:$0xf]
    %v1191 = vld [vmem:[%s1182 + $0x20] sm:$0xf]
    %v1192 = vld [vmem:[%s1182 + $0x24] sm:$0xf]
    %v1193 = vld [vmem:[%s1182 + $0x28] sm:$0xf]
    %v1194 = vld [vmem:[%s1182 + $0x2c] sm:$0xf]
    %v1195 = vld [vmem:[%s1182 + $0x30] sm:$0xf]
    %v1196 = vld [vmem:[%s1182 + $0x34] sm:$0xf]
    %v1197 = vld [vmem:[%s1182 + $0x38] sm:$0xf]
    %v1198 = vld [vmem:[%s1182 + $0x3c] sm:$0xf]
    %v1199 = vld [vmem:[%s1182 + $0x40] sm:$0xf]
    %v1200 = vld [vmem:[%s1182 + $0x44] sm:$0xf]
    %v1201 = vld [vmem:[%s1182 + $0x48] sm:$0xf]
    %v1202 = vld [vmem:[%s1182 + $0x4c] sm:$0xf]
    %v1203 = vld [vmem:[%s1182 + $0x50] sm:$0xf]
    %v1204 = vld [vmem:[%s1182 + $0x54] sm:$0xf]
    %v1205 = vld [vmem:[%s1182 + $0x58] sm:$0xf]
    %v1206 = vld [vmem:[%s1182 + $0x5c] sm:$0xf]
    %v1207 = vld [vmem:[%s1182 + $0x60] sm:$0xf]
    %v1208 = vld [vmem:[%s1182 + $0x64] sm:$0xf]
    %v1209 = vld [vmem:[%s1182 + $0x68] sm:$0xf]
    %v1210 = vld [vmem:[%s1182 + $0x6c] sm:$0xf]
    %v1211 = vld [vmem:[%s1182 + $0x70] sm:$0xf]
    %v1212 = vld [vmem:[%s1182 + $0x74] sm:$0xf]
    %v1213 = vld [vmem:[%s1182 + $0x78] sm:$0xf]
    %v1214 = vld [vmem:[%s1182 + $0x7c] sm:$0xf]
    %vm1215 = vsmask.f32 7424
    %v1217 = vshrl.u32 %v981, 16
    %v1219 = vshll.u32 %v981, 16
    %v1221 = vrot.slane %v1219, 1
    %v1222 = vor.u32 %v1217, %v1221
    %v1224 = vshll.u32 %v948, 16
    %v1226 = vrot.slane %v1224, 1
    %v1227 = vsel %vm1215, %v1222, %v1226
    %v1229 = vshrl.u32 %v982, 16
    %v1231 = vshll.u32 %v982, 16
    %v1233 = vrot.slane %v1231, 1
    %v1234 = vor.u32 %v1229, %v1233
    %v1236 = vshll.u32 %v956, 16
    %v1238 = vrot.slane %v1236, 1
    %v1239 = vsel %vm1215, %v1234, %v1238
    %v1240 = vshrl.u32 %v948, 16
    %v1242 = vor.u32 %v1240, %v1226
    %v1244 = vshll.u32 %v985, 16
    %v1246 = vrot.slane %v1244, 1
    %v1247 = vsel %vm1215, %v1242, %v1246
    %v1248 = vshrl.u32 %v956, 16
    %v1250 = vor.u32 %v1248, %v1238
    %v1252 = vshll.u32 %v986, 16
    %v1254 = vrot.slane %v1252, 1
    %v1255 = vsel %vm1215, %v1250, %v1254
    %v1256 = vshrl.u32 %v985, 16
    %v1258 = vor.u32 %v1256, %v1246
    %v1259 = vshrl.u32 %v986, 16
    %v1261 = vor.u32 %v1259, %v1254
    %v1300 = vunpack.c.l.b16 %v1183
    %v1301 = vunpack.c.l.b16 %v1184
    %v1302 = vunpack.c.l.b16 %v1185
    %v1303 = vunpack.c.l.b16 %v1186
    %v1304 = vunpack.c.l.b16 %v1187
    %v1305 = vunpack.c.l.b16 %v1188
    %v1306 = vunpack.c.l.b16 %v1189
    %v1307 = vunpack.c.l.b16 %v1190
    %v1308 = vunpack.c.l.b16 %v1191
    %v1309 = vunpack.c.l.b16 %v1192
    %v1310 = vunpack.c.l.b16 %v1193
    %v1311 = vunpack.c.l.b16 %v1194
    %v1312 = vunpack.c.l.b16 %v1195
    %v1313 = vunpack.c.l.b16 %v1196
    %v1314 = vunpack.c.l.b16 %v1197
    %v1315 = vunpack.c.l.b16 %v1198
    %v1316 = vunpack.c.l.b16 %v1199
    %v1317 = vunpack.c.l.b16 %v1200
    %v1318 = vunpack.c.l.b16 %v1201
    %v1319 = vunpack.c.l.b16 %v1202
    %v1320 = vunpack.c.l.b16 %v1203
    %v1321 = vunpack.c.l.b16 %v1204
    %v1322 = vunpack.c.l.b16 %v1205
    %v1323 = vunpack.c.l.b16 %v1206
    %v1324 = vunpack.c.l.b16 %v1207
    %v1325 = vunpack.c.l.b16 %v1208
    %v1326 = vunpack.c.l.b16 %v1209
    %v1327 = vunpack.c.l.b16 %v1210
    %v1328 = vunpack.c.l.b16 %v1211
    %v1329 = vunpack.c.l.b16 %v1212
    %v1330 = vunpack.c.l.b16 %v1213
    %v1331 = vunpack.c.l.b16 %v1214
    %v1332 = vpack.c.b16 %v1301, %v1300
    %v1333 = vpack.c.b16 %v1303, %v1302
    %v1334 = vpack.c.b16 %v1305, %v1304
    %v1335 = vpack.c.b16 %v1307, %v1306
    %v1336 = vpack.c.b16 %v1309, %v1308
    %v1337 = vpack.c.b16 %v1311, %v1310
    %v1338 = vpack.c.b16 %v1313, %v1312
    %v1339 = vpack.c.b16 %v1315, %v1314
    %v1340 = vpack.c.b16 %v1317, %v1316
    %v1341 = vpack.c.b16 %v1319, %v1318
    %v1342 = vpack.c.b16 %v1321, %v1320
    %v1343 = vpack.c.b16 %v1323, %v1322
    %v1344 = vpack.c.b16 %v1325, %v1324
    %v1345 = vpack.c.b16 %v1327, %v1326
    %v1346 = vpack.c.b16 %v1329, %v1328
    %v1347 = vpack.c.b16 %v1331, %v1330
    %1364 = vmatprep.subr.bf16.mxu0 0
    %1365 = vmatpush1.bf16.msra.mxu0 %v1332
    %1366 = vmatprep.subr.bf16.mxu0 0
    %1367 = vmatpush1.bf16.msra.mxu0 %v1333
    %1368 = vmatprep.subr.bf16.mxu0 0
    %1369 = vmatpush1.bf16.msra.mxu0 %v1334
    %1370 = vmatprep.subr.bf16.mxu0 0
    %1371 = vmatpush1.bf16.msra.mxu0 %v1335
    %1372 = vmatprep.subr.bf16.mxu0 0
    %1373 = vmatpush1.bf16.msra.mxu0 %v1336
    %1374 = vmatprep.subr.bf16.mxu0 0
    %1375 = vmatpush1.bf16.msra.mxu0 %v1337
    %1376 = vmatprep.subr.bf16.mxu0 0
    %1377 = vmatpush1.bf16.msra.mxu0 %v1338
    %1378 = vmatprep.subr.bf16.mxu0 0
    %1379 = vmatpush1.bf16.msra.mxu0 %v1339
    %1380 = vmatprep.subr.bf16.mxu0 0
    %1381 = vmatpush1.bf16.msra.mxu0 %v1340
    %1382 = vmatprep.subr.bf16.mxu0 0
    %1383 = vmatpush1.bf16.msra.mxu0 %v1341
    %1384 = vmatprep.subr.bf16.mxu0 0
    %1385 = vmatpush1.bf16.msra.mxu0 %v1342
    %1386 = vmatprep.subr.bf16.mxu0 0
    %1387 = vmatpush1.bf16.msra.mxu0 %v1343
    %1388 = vmatprep.subr.bf16.mxu0 0
    %1389 = vmatpush1.bf16.msra.mxu0 %v1344
    %1390 = vmatprep.subr.bf16.mxu0 0
    %1391 = vmatpush1.bf16.msra.mxu0 %v1345
    %1392 = vmatprep.subr.bf16.mxu0 0
    %1393 = vmatpush1.bf16.msra.mxu0 %v1346
    %1394 = vmatprep.subr.bf16.mxu0 0
    %1395 = vmatpush1.bf16.msra.mxu0 %v1347
    %1396 = vmatprep.mubr.bf16.mxu0 %v1239
    %1397 = vmatmul.mubr.bf16.gmra.mrb[0].mxu0 %v1227
    %v1398 = vpop.f32.mrb[0].mxu0
    %v1399 = vadd.f32 0.0, %v1398
    %v1400 = vpop.f32.mrb[0].mxu0
    %v1401 = vpop.f32.mrb[0].mxu0
    %v1402 = vadd.f32 0.0, %v1401
    %v1403 = vpop.f32.mrb[0].mxu0
    %1404 = vmatprep.mubr.bf16.mxu0 %v1255
    %1405 = vmatmul.mubr.bf16.gmra.mrb[0].mxu0 %v1247
    %v1406 = vpop.f32.mrb[0].mxu0
    %v1407 = vpop.f32.mrb[0].mxu0
    %v1408 = vpop.f32.mrb[0].mxu0
    %v1409 = vadd.f32 0.0, %v1408
    %v1410 = vpop.f32.mrb[0].mxu0
    %1411 = vmatprep.mubr.bf16.mxu0 %v1261
    %1412 = vmatmul.mubr.bf16.gmra.mrb[0].mxu0 %v1258
    %v1413 = vpop.f32.mrb[0].mxu0
    %v1414 = vadd.f32 0.0, %v1413
    %v1415 = vpop.f32.mrb[0].mxu0
    %v1416 = vpop.f32.mrb[0].mxu0
    %v1417 = vpop.f32.mrb[0].mxu0
    %1418 = vdwg.mxu0
    %v1419 = vadd.f32 %v1178, %v1399
    %v1420 = vadd.f32 %v1179, %v1402
    %v1421 = vadd.f32 %v1180, %v1409
    %v1422 = vadd.f32 %v1181, %v1414
    %s1423 = scalar_lea.vmem [#allocation5], 256
    %v1424 = vld [vmem:[%s1423] sm:$0xf]
    %v1425 = vld [vmem:[%s1423 + $0x4] sm:$0xf]
    %v1426 = vld [vmem:[%s1423 + $0x8] sm:$0xf]
    %v1427 = vld [vmem:[%s1423 + $0xc] sm:$0xf]
    %v1428 = vld [vmem:[%s1423 + $0x10] sm:$0xf]
    %v1429 = vld [vmem:[%s1423 + $0x14] sm:$0xf]
    %v1430 = vld [vmem:[%s1423 + $0x18] sm:$0xf]
    %v1431 = vld [vmem:[%s1423 + $0x1c] sm:$0xf]
    %v1432 = vld [vmem:[%s1423 + $0x20] sm:$0xf]
    %v1433 = vld [vmem:[%s1423 + $0x24] sm:$0xf]
    %v1434 = vld [vmem:[%s1423 + $0x28] sm:$0xf]
    %v1435 = vld [vmem:[%s1423 + $0x2c] sm:$0xf]
    %v1436 = vld [vmem:[%s1423 + $0x30] sm:$0xf]
    %v1437 = vld [vmem:[%s1423 + $0x34] sm:$0xf]
    %v1438 = vld [vmem:[%s1423 + $0x38] sm:$0xf]
    %v1439 = vld [vmem:[%s1423 + $0x3c] sm:$0xf]
    %v1440 = vld [vmem:[%s1423 + $0x40] sm:$0xf]
    %v1441 = vld [vmem:[%s1423 + $0x44] sm:$0xf]
    %v1442 = vld [vmem:[%s1423 + $0x48] sm:$0xf]
    %v1443 = vld [vmem:[%s1423 + $0x4c] sm:$0xf]
    %v1444 = vld [vmem:[%s1423 + $0x50] sm:$0xf]
    %v1445 = vld [vmem:[%s1423 + $0x54] sm:$0xf]
    %v1446 = vld [vmem:[%s1423 + $0x58] sm:$0xf]
    %v1447 = vld [vmem:[%s1423 + $0x5c] sm:$0xf]
    %v1448 = vld [vmem:[%s1423 + $0x60] sm:$0xf]
    %v1449 = vld [vmem:[%s1423 + $0x64] sm:$0xf]
    %v1450 = vld [vmem:[%s1423 + $0x68] sm:$0xf]
    %v1451 = vld [vmem:[%s1423 + $0x6c] sm:$0xf]
    %v1452 = vld [vmem:[%s1423 + $0x70] sm:$0xf]
    %v1453 = vld [vmem:[%s1423 + $0x74] sm:$0xf]
    %v1454 = vld [vmem:[%s1423 + $0x78] sm:$0xf]
    %v1455 = vld [vmem:[%s1423 + $0x7c] sm:$0xf]
    %v1460 = vrot.slane %v981, 1
    %v1461 = vrot.slane %v948, 1
    %v1462 = vsel %vm241, %v1460, %v1461
    %v1463 = vrot.slane %v982, 1
    %v1464 = vrot.slane %v956, 1
    %v1465 = vsel %vm241, %v1463, %v1464
    %v1466 = vrot.slane %v985, 1
    %v1467 = vsel %vm241, %v1461, %v1466
    %v1468 = vrot.slane %v986, 1
    %v1469 = vsel %vm241, %v1464, %v1468
    %v1508 = vunpack.c.l.b16 %v1424
    %v1509 = vunpack.c.l.b16 %v1425
    %v1510 = vunpack.c.l.b16 %v1426
    %v1511 = vunpack.c.l.b16 %v1427
    %v1512 = vunpack.c.l.b16 %v1428
    %v1513 = vunpack.c.l.b16 %v1429
    %v1514 = vunpack.c.l.b16 %v1430
    %v1515 = vunpack.c.l.b16 %v1431
    %v1516 = vunpack.c.l.b16 %v1432
    %v1517 = vunpack.c.l.b16 %v1433
    %v1518 = vunpack.c.l.b16 %v1434
    %v1519 = vunpack.c.l.b16 %v1435
    %v1520 = vunpack.c.l.b16 %v1436
    %v1521 = vunpack.c.l.b16 %v1437
    %v1522 = vunpack.c.l.b16 %v1438
    %v1523 = vunpack.c.l.b16 %v1439
    %v1524 = vunpack.c.l.b16 %v1440
    %v1525 = vunpack.c.l.b16 %v1441
    %v1526 = vunpack.c.l.b16 %v1442
    %v1527 = vunpack.c.l.b16 %v1443
    %v1528 = vunpack.c.l.b16 %v1444
    %v1529 = vunpack.c.l.b16 %v1445
    %v1530 = vunpack.c.l.b16 %v1446
    %v1531 = vunpack.c.l.b16 %v1447
    %v1532 = vunpack.c.l.b16 %v1448
    %v1533 = vunpack.c.l.b16 %v1449
    %v1534 = vunpack.c.l.b16 %v1450
    %v1535 = vunpack.c.l.b16 %v1451
    %v1536 = vunpack.c.l.b16 %v1452
    %v1537 = vunpack.c.l.b16 %v1453
    %v1538 = vunpack.c.l.b16 %v1454
    %v1539 = vunpack.c.l.b16 %v1455
    %v1540 = vpack.c.b16 %v1509, %v1508
    %v1541 = vpack.c.b16 %v1511, %v1510
    %v1542 = vpack.c.b16 %v1513, %v1512
    %v1543 = vpack.c.b16 %v1515, %v1514
    %v1544 = vpack.c.b16 %v1517, %v1516
    %v1545 = vpack.c.b16 %v1519, %v1518
    %v1546 = vpack.c.b16 %v1521, %v1520
    %v1547 = vpack.c.b16 %v1523, %v1522
    %v1548 = vpack.c.b16 %v1525, %v1524
    %v1549 = vpack.c.b16 %v1527, %v1526
    %v1550 = vpack.c.b16 %v1529, %v1528
    %v1551 = vpack.c.b16 %v1531, %v1530
    %v1552 = vpack.c.b16 %v1533, %v1532
    %v1553 = vpack.c.b16 %v1535, %v1534
    %v1554 = vpack.c.b16 %v1537, %v1536
    %v1555 = vpack.c.b16 %v1539, %v1538
    %1572 = vmatprep.subr.bf16.mxu0 0
    %1573 = vmatpush1.bf16.msra.mxu0 %v1540
    %1574 = vmatprep.subr.bf16.mxu0 0
    %1575 = vmatpush1.bf16.msra.mxu0 %v1541
    %1576 = vmatprep.subr.bf16.mxu0 0
    %1577 = vmatpush1.bf16.msra.mxu0 %v1542
    %1578 = vmatprep.subr.bf16.mxu0 0
    %1579 = vmatpush1.bf16.msra.mxu0 %v1543
    %1580 = vmatprep.subr.bf16.mxu0 0
    %1581 = vmatpush1.bf16.msra.mxu0 %v1544
    %1582 = vmatprep.subr.bf16.mxu0 0
    %1583 = vmatpush1.bf16.msra.mxu0 %v1545
    %1584 = vmatprep.subr.bf16.mxu0 0
    %1585 = vmatpush1.bf16.msra.mxu0 %v1546
    %1586 = vmatprep.subr.bf16.mxu0 0
    %1587 = vmatpush1.bf16.msra.mxu0 %v1547
    %1588 = vmatprep.subr.bf16.mxu0 0
    %1589 = vmatpush1.bf16.msra.mxu0 %v1548
    %1590 = vmatprep.subr.bf16.mxu0 0
    %1591 = vmatpush1.bf16.msra.mxu0 %v1549
    %1592 = vmatprep.subr.bf16.mxu0 0
    %1593 = vmatpush1.bf16.msra.mxu0 %v1550
    %1594 = vmatprep.subr.bf16.mxu0 0
    %1595 = vmatpush1.bf16.msra.mxu0 %v1551
    %1596 = vmatprep.subr.bf16.mxu0 0
    %1597 = vmatpush1.bf16.msra.mxu0 %v1552
    %1598 = vmatprep.subr.bf16.mxu0 0
    %1599 = vmatpush1.bf16.msra.mxu0 %v1553
    %1600 = vmatprep.subr.bf16.mxu0 0
    %1601 = vmatpush1.bf16.msra.mxu0 %v1554
    %1602 = vmatprep.subr.bf16.mxu0 0
    %1603 = vmatpush1.bf16.msra.mxu0 %v1555
    %1604 = vmatprep.mubr.bf16.mxu0 %v1465
    %1605 = vmatmul.mubr.bf16.gmra.mrb[0].mxu0 %v1462
    %v1606 = vpop.f32.mrb[0].mxu0
    %v1607 = vadd.f32 0.0, %v1606
    %v1608 = vpop.f32.mrb[0].mxu0
    %v1609 = vpop.f32.mrb[0].mxu0
    %v1610 = vadd.f32 0.0, %v1609
    %v1611 = vpop.f32.mrb[0].mxu0
    %1612 = vmatprep.mubr.bf16.mxu0 %v1469
    %1613 = vmatmul.mubr.bf16.gmra.mrb[0].mxu0 %v1467
    %v1614 = vpop.f32.mrb[0].mxu0
    %v1615 = vpop.f32.mrb[0].mxu0
    %v1616 = vpop.f32.mrb[0].mxu0
    %v1617 = vadd.f32 0.0, %v1616
    %v1618 = vpop.f32.mrb[0].mxu0
    %1619 = vmatprep.mubr.bf16.mxu0 %v1468
    %1620 = vmatmul.mubr.bf16.gmra.mrb[0].mxu0 %v1466
    %v1621 = vpop.f32.mrb[0].mxu0
    %v1622 = vadd.f32 0.0, %v1621
    %v1623 = vpop.f32.mrb[0].mxu0
    %v1624 = vpop.f32.mrb[0].mxu0
    %v1625 = vpop.f32.mrb[0].mxu0
    %1626 = vdwg.mxu0
    %v1627 = vadd.f32 %v1419, %v1607
    %v1628 = vadd.f32 %v1420, %v1610
    %v1629 = vadd.f32 %v1421, %v1617
    %v1630 = vadd.f32 %v1422, %v1622
    %v1631 = vmax.f32 %v1627, 0.0
    %v1632 = vmax.f32 %v1628, 0.0
    %v1633 = vmax.f32 %v1629, 0.0
    %v1634 = vmax.f32 %v1630, 0.0
    %1635 = vst [vmem:[#allocation7] sm:$0xff] %v1631
    %1636 = vst [vmem:[#allocation7 + $0x8] sm:$0xff] %v1632
    %s1637 = scalar_lea.vmem [#allocation7], 16
    %1638 = vst [vmem:[%s1637] sm:$0xff] %v1633
    %1639 = vst [vmem:[%s1637 + $0x8] sm:$0xff] %v1634
    // Predicated region
    $region38: #{tpu_custom_call.1} parent=1 // pred_check
      _
    $region39: #{tpu_custom_call.1} parent=1 // pred_check_branch
      %1641 = sbr.rel (0) target = $region41
    $region40: #{tpu_custom_call.1} parent=1 // pred_region
      %s1643 = ssub.s32 512, 512
      %1644 = vsyncadd [#allocation4], %s1643
      %s1645 = sshll.u32 [#allocation7], 4
      %s1646 = int_to_ptr.vmem [resolvable:$true] %s1645
      %1651 = dma.vmem_to_hbm [thread:$0]  %s1646, 512, %s7, [#allocation4], 128, 128, 8
    $region41: #{tpu_custom_call.1} parent=1 // pred_fallthru
      _
    // Predicated region
    $region42: #{tpu_custom_call.1} parent=1 // pred_check
      _
    $region43: #{tpu_custom_call.1} parent=1 // pred_check_branch
      %1653 = sbr.rel (0) target = $region45
    $region44: #{tpu_custom_call.1} parent=1 // pred_region
      %1654 = dma.done [#allocation4], 512
    $region45: #{tpu_custom_call.1} parent=1 // pred_fallthru
      _
    %1655 = vsyncpa [#allocation3], 1
    %1656 = vsyncpa [#allocation6], 1
    %1657 = vsyncpa [#allocation4], 1

</llo_original>
